<compile_context>
chip_gen: v7x
topology: tpu7x:2x2x1
jax: 0.10.0
libtpu: 0.0.40
codegen_flags: <defaults>
</compile_context>

<pallas_src>
import functools

import jax
import jax.numpy as jnp
from jax.experimental import pallas as pl
from jax.experimental.pallas import tpu as pltpu


# ----------------------------------------------------------------------------
# Pallas kernel: one (batch, hash) row = all K buckets of that hash round
# ----------------------------------------------------------------------------
def _lsh_bucket_attention_kernel(x_ref, y_ref, ret_ref, bscore_ref):
    # x_ref:      (1, 1, K, cs, C)   match features
    # y_ref:      (1, 1, K, cs, Cr)  assembly features
    # ret_ref:    (1, 1, Cr, K*cs)   attention output, transposed -> lane-dense stores
    # bscore_ref: (1, 1, K,  cs)     logsumexp bucket scores, lane-dense stores
    K = x_ref.shape[2]
    cs = x_ref.shape[3]
    eps = jnp.float32(5e-5)

    x_all = x_ref[0, 0].astype(jnp.float32)      # (K, cs, C)
    y_all = y_ref[0, 0].astype(jnp.float32)      # (K, cs, Cr)

    # L2-normalize the match features once for all K chunks.
    # 1/max(||x||, eps) == rsqrt(max(||x||^2, eps^2)); rsqrt runs on the EUP slot.
    ss = jnp.sum(x_all * x_all, axis=-1, keepdims=True)
    x_nrm = x_all * jax.lax.rsqrt(jnp.maximum(ss, eps * eps))

    # NOTE: contraction dim C (=4) heavily underfills the MXU; batching all K buckets per
    # grid step amortizes the per-step / MXU prologue cost over the whole hash row.
    for k in range(K):                           # K is a small compile-time constant
        q_bf = x_all[k].astype(jnp.bfloat16)     # (cs, C) un-normalized queries (MXU operand)
        adj = (k, (k - 1) % K, (k + 1) % K)      # [current, back, forward] buckets

        # raw^T: keys on sublanes, queries on lanes -> one (cs, cs) tile per adjacent bucket.
        raw_t = [
            jax.lax.dot_general(x_nrm[j].astype(jnp.bfloat16), q_bf,
                                (((1,), (1,)), ((), ())),
                                preferred_element_type=jnp.float32)
            for j in adj
        ]

        # Softmax statistics over the key (sublane) axis -> lane-dense (1, cs) rows.
        m = jnp.max(raw_t[0], axis=0, keepdims=True)
        for r in raw_t[1:]:
            m = jnp.maximum(m, jnp.max(r, axis=0, keepdims=True))
        e = [jnp.exp(r - m) for r in raw_t]                      # single exp pass, reused
        s = (jnp.sum(e[0], axis=0, keepdims=True)
             + jnp.sum(e[1], axis=0, keepdims=True)
             + jnp.sum(e[2], axis=0, keepdims=True))             # (1, cs)

        # out^T = sum_j y_j^T @ e_j ; normalize once on the small (Cr, cs) tile.
        acc = jax.lax.dot_general(y_all[adj[0]].astype(jnp.bfloat16),
                                  e[0].astype(jnp.bfloat16),
                                  (((0,), (0,)), ((), ())),
                                  preferred_element_type=jnp.float32)
        for idx in (1, 2):
            acc = acc + jax.lax.dot_general(y_all[adj[idx]].astype(jnp.bfloat16),
                                            e[idx].astype(jnp.bfloat16),
                                            (((0,), (0,)), ((), ())),
                                            preferred_element_type=jnp.float32)
        out_t = acc * pl.reciprocal(s, approx=True)              # (Cr, cs)
        lse = m + jnp.log(s)                                     # (1, cs)  bucket_score

        ret_ref[0, 0, :, k * cs:(k + 1) * cs] = out_t.astype(ret_ref.dtype)
        bscore_ref[0, 0, k:k + 1, :] = lse.astype(bscore_ref.dtype)


def lsh_attention_pallas(x_b, y_b):
    """x_b: (N, nh, K, cs, C), y_b: (N, nh, K, cs, Cr)
       -> ret (N, nh, K*cs, Cr), bucket_score (N, nh, K*cs)."""
    N, nh, K, cs, C = x_b.shape
    Cr = y_b.shape[-1]

    grid_spec = pltpu.PrefetchScalarGridSpec(
        num_scalar_prefetch=0,
        grid=(N, nh),
        in_specs=[
            pl.BlockSpec((1, 1, K, cs, C), lambda n, h: (n, h, 0, 0, 0)),
            pl.BlockSpec((1, 1, K, cs, Cr), lambda n, h: (n, h, 0, 0, 0)),
        ],
        out_specs=[
            pl.BlockSpec((1, 1, Cr, K * cs), lambda n, h: (n, h, 0, 0)),
            pl.BlockSpec((1, 1, K, cs), lambda n, h: (n, h, 0, 0)),
        ],
    )

    ret_t, bscore = pl.pallas_call(
        _lsh_bucket_attention_kernel,
        out_shape=(
            jax.ShapeDtypeStruct((N, nh, Cr, K * cs), jnp.float32),
            jax.ShapeDtypeStruct((N, nh, K, cs), jnp.float32),
        ),
        grid_spec=grid_spec,
        compiler_params=pltpu.CompilerParams(
            dimension_semantics=("parallel", "parallel")),
    )(x_b, y_b)

    ret = jnp.swapaxes(ret_t, 2, 3)              # (N, nh, K*cs, Cr) — layout plumbing only
    bscore = bscore.reshape(N, nh, K * cs)
    return ret, bscore


# ----------------------------------------------------------------------------
# Pure-JAX reference of the bucket attention (relocated unit test, not on the hot path)
# ----------------------------------------------------------------------------
def lsh_attention_ref(x_b, y_b, match_dtype=jnp.float32):
    """Matches the PyTorch math with match_dtype=float32. With match_dtype=bfloat16 the
    two matmuls use the same bf16 operands as the Pallas kernel so the comparison
    isolates structural errors from MXU-precision effects."""
    eps = jnp.float32(5e-5)
    ss = jnp.sum(x_b * x_b, axis=-1, keepdims=True)
    x_n = x_b * jax.lax.rsqrt(jnp.maximum(ss, eps * eps))   # == x / max(||x||, eps)

    def add_adjacent(t):  # [current, back, forward] along the bucket axis
        return jnp.concatenate([t, jnp.roll(t, 1, axis=2), jnp.roll(t, -1, axis=2)], axis=3)

    x_match = add_adjacent(x_n).astype(match_dtype)
    y_all = add_adjacent(y_b).astype(match_dtype)
    raw = jnp.einsum('bhkie,bhkje->bhkij', x_b.astype(match_dtype), x_match,
                     preferred_element_type=jnp.float32)
    m = jnp.max(raw, axis=-1, keepdims=True)
    e = jnp.exp(raw - m)
    s = jnp.sum(e, axis=-1, keepdims=True)
    lse = m + jnp.log(s)
    ret = jnp.einsum('bhkij,bhkje->bhkie', e.astype(match_dtype), y_all,
                     preferred_element_type=jnp.float32) / s
    N, nh, K, cs, Cr = ret.shape
    return ret.reshape(N, nh, K * cs, Cr), lse.reshape(N, nh, K * cs)


# ----------------------------------------------------------------------------
# Glue: convs, LSH hashing, sort / unsort, mixing across hash rounds
# ----------------------------------------------------------------------------
def conv2d_nchw(x, w, b, padding):
    out = jax.lax.conv_general_dilated(
        x, w, window_strides=(1, 1),
        padding=[(padding, padding), (padding, padding)],
        dimension_numbers=('NCHW', 'OIHW', 'NCHW'))
    return out + b[None, :, None, None]


def non_local_sparse_attention(x, params, lsh_key, *, n_hashes=4, reduction=4,
                               chunk_size=128, res_scale=1.0):
    # chunk_size=128 aligns the per-chunk tiles with the 128-wide TPU lane/MXU dimension
    # (the PyTorch default of 144 also works, it just pads lanes).
    N, _, H, W = x.shape
    L = H * W

    # conv_match: 3x3 conv channels -> channels // reduction ; conv_assembly: 1x1, channels -> channels
    x_embed = conv2d_nchw(x, params['w_match'], params['b_match'], padding=1)
    y_embed = conv2d_nchw(x, params['w_asm'], params['b_asm'], padding=0)
    C = x_embed.shape[1]
    Cr = y_embed.shape[1]
    x_embed = x_embed.reshape(N, C, L).transpose(0, 2, 1)    # (N, L, C)
    y_embed = y_embed.reshape(N, Cr, L).transpose(0, 2, 1)   # (N, L, Cr)

    hash_buckets = min(L // chunk_size + (L // chunk_size) % 2, 128)

    # --- LSH hashing (random rotations drawn fresh each forward, deterministic via lsh_key) ---
    rr = jax.random.normal(lsh_key, (1, C, n_hashes, hash_buckets // 2), dtype=x_embed.dtype)
    rr = jnp.broadcast_to(rr, (N, C, n_hashes, hash_buckets // 2))
    rot = jnp.einsum('btf,bfhi->bhti', x_embed, rr)
    rot = jnp.concatenate([rot, -rot], axis=-1)
    hash_codes = jnp.argmax(rot, axis=-1)                                # (N, nh, L)
    offsets = (jnp.arange(n_hashes, dtype=hash_codes.dtype) * hash_buckets).reshape(1, -1, 1)
    hash_codes = (hash_codes + offsets).reshape(N, -1)                   # (N, nh*L)

    # --- sort tokens by hash code, remember inverse permutation ---
    indices = jnp.argsort(hash_codes, axis=-1)
    undo_sort = jnp.argsort(indices, axis=-1)
    mod_indices = indices % L

    gather_x = jnp.broadcast_to(mod_indices[:, :, None], (N, mod_indices.shape[1], C))
    gather_y = jnp.broadcast_to(mod_indices[:, :, None], (N, mod_indices.shape[1], Cr))
    x_sorted = jnp.take_along_axis(x_embed, gather_x, axis=1)            # (N, nh*L, C)
    y_sorted = jnp.take_along_axis(y_embed, gather_y, axis=1)            # (N, nh*L, Cr)

    padding = chunk_size - L % chunk_size if L % chunk_size != 0 else 0
    x_b = x_sorted.reshape(N, n_hashes, L, C)
    y_b = y_sorted.reshape(N, n_hashes, L, Cr)
    if padding:
        x_b = jnp.concatenate([x_b, x_b[:, :, -padding:, :]], axis=2)
        y_b = jnp.concatenate([y_b, y_b[:, :, -padding:, :]], axis=2)
    K = x_b.shape[2] // chunk_size
    x_b = x_b.reshape(N, n_hashes, K, chunk_size, C)
    y_b = y_b.reshape(N, n_hashes, K, chunk_size, Cr)

    # --- hot path in Pallas (ret: (N, nh, K*cs, Cr), bscore: (N, nh, K*cs)) ---
    ret, bscore = lsh_attention_pallas(x_b, y_b)

    if padding:
        ret = ret[:, :, :-padding, :]
        bscore = bscore[:, :, :-padding]
    ret = ret.reshape(N, n_hashes * L, Cr)
    bscore = bscore.reshape(N, n_hashes * L)

    # --- undo sort ---
    ungather = jnp.broadcast_to(undo_sort[:, :, None], (N, undo_sort.shape[1], Cr))
    ret = jnp.take_along_axis(ret, ungather, axis=1)
    bscore = jnp.take_along_axis(bscore, undo_sort, axis=1)

    # --- mix across hash rounds ---
    ret = ret.reshape(N, n_hashes, L, Cr)
    bscore = bscore.reshape(N, n_hashes, L, 1)
    probs = jax.nn.softmax(bscore, axis=1)
    ret = jnp.sum(ret * probs, axis=1)                                   # (N, L, Cr)

    out = ret.transpose(0, 2, 1).reshape(N, Cr, H, W) * res_scale + x
    return out


def init_params(key, channels, reduction):
    k0, k1, k2, k3 = jax.random.split(key, 4)
    c_red = channels // reduction
    return {
        # conv_match: default_conv(channels, channels//reduction, k=3, bias=True)
        'w_match': 0.1 * jax.random.normal(k0, (c_red, channels, 3, 3), dtype=jnp.float32),
        'b_match': 0.1 * jax.random.normal(k1, (c_red,), dtype=jnp.float32),
        # conv_assembly: default_conv(channels, channels, k=1, bias=True)
        'w_asm': 0.1 * jax.random.normal(k2, (channels, channels, 1, 1), dtype=jnp.float32),
        'b_asm': 0.1 * jax.random.normal(k3, (channels,), dtype=jnp.float32),
        # TODO(synk): self.conv1 (Conv2d(32, 8, 3)) is defined in __init__ but never used in forward.
    }


if __name__ == "__main__":
    key = jax.random.PRNGKey(0)
    k_param, k_input, k_lsh, k_xb, k_yb = jax.random.split(key, 5)

    N, channels, H, W = 2, 16, 16, 16      # L = 256, chunk_size = 128 -> K = 2 chunks, no padding
    reduction = 4
    n_hashes = 4
    chunk_size = 128

    # --- relocated unit test: Pallas bucket attention vs pure-JAX reference ---
    K, cs, C, Cr = 2, chunk_size, channels // reduction, channels
    x_b = jax.random.normal(k_xb, (N, n_hashes, K, cs, C), dtype=jnp.float32)
    y_b = jax.random.normal(k_yb, (N, n_hashes, K, cs, Cr), dtype=jnp.float32)
    ret_p, lse_p = jax.block_until_ready(lsh_attention_pallas(x_b, y_b))
    ret_r, lse_r = lsh_attention_ref(x_b, y_b, match_dtype=jnp.bfloat16)
    assert jnp.allclose(ret_p, ret_r, rtol=3e-2, atol=3e-2), "bucket attention mismatch"
    assert jnp.allclose(lse_p, lse_r, rtol=3e-2, atol=3e-2), "bucket score mismatch"

    # --- full forward pass ---
    params = init_params(k_param, channels, reduction)
    x = jax.random.normal(k_input, (N, channels, H, W), dtype=jnp.float32)

    fwd = jax.jit(functools.partial(non_local_sparse_attention,
                                    n_hashes=n_hashes, reduction=reduction,
                                    chunk_size=chunk_size, res_scale=1.0))
    out = jax.block_until_ready(fwd(x, params, k_lsh))
    assert out.shape == (N, channels, H, W)
    assert bool(jnp.all(jnp.isfinite(out)))
    print("KERNEL_OK")
</pallas_src>

<mosaic_0001>
module attributes {stable_mosaic.version = 11 : i64} {
  func.func @_lsh_bucket_attention_kernel(%arg0: i32, %arg1: i32, %arg2: memref<1x1x2x128x4xf32, #tpu.memory_space<vmem>>, %arg3: memref<1x1x2x128x16xf32, #tpu.memory_space<vmem>>, %arg4: memref<1x1x16x256xf32, #tpu.memory_space<vmem>>, %arg5: memref<1x1x2x128xf32, #tpu.memory_space<vmem>>) attributes {dimension_semantics = [#tpu.dimension_semantics<parallel>, #tpu.dimension_semantics<parallel>], iteration_bounds = array<i64: 2, 4>, scalar_prefetch = 0 : i64, scratch_operands = 0 : i64, tpu.core_type = #tpu.core_type<tc>, window_params = [{transform_indices = @transform_0, window_bounds = array<i64: 1, 1, 2, 128, 4>}, {transform_indices = @transform_1, window_bounds = array<i64: 1, 1, 2, 128, 16>}, {transform_indices = @transform_2, window_bounds = array<i64: 1, 1, 16, 256>}, {transform_indices = @transform_3, window_bounds = array<i64: 1, 1, 2, 128>}]} {
    %c0 = arith.constant 0 : index
    %c0_0 = arith.constant 0 : index
    %c0_1 = arith.constant 0 : index
    %c0_2 = arith.constant 0 : index
    %c0_3 = arith.constant 0 : index
    %0 = vector.load %arg2[%c0, %c0_0, %c0_1, %c0_2, %c0_3] : memref<1x1x2x128x4xf32, #tpu.memory_space<vmem>>, vector<1x1x2x128x4xf32>
    %1 = vector.shape_cast %0 : vector<1x1x2x128x4xf32> to vector<2x128x4xf32>
    %c0_4 = arith.constant 0 : index
    %c0_5 = arith.constant 0 : index
    %c0_6 = arith.constant 0 : index
    %c0_7 = arith.constant 0 : index
    %c0_8 = arith.constant 0 : index
    %2 = vector.load %arg3[%c0_4, %c0_5, %c0_6, %c0_7, %c0_8] : memref<1x1x2x128x16xf32, #tpu.memory_space<vmem>>, vector<1x1x2x128x16xf32>
    %3 = vector.shape_cast %2 : vector<1x1x2x128x16xf32> to vector<2x128x16xf32>
    %4 = arith.mulf %1, %1 : vector<2x128x4xf32>
    %cst = arith.constant dense<0.000000e+00> : vector<2x128xf32>
    %5 = vector.multi_reduction <add>, %4, %cst [2] : vector<2x128x4xf32> to vector<2x128xf32>
    %6 = vector.shape_cast %5 : vector<2x128xf32> to vector<2x128x1xf32>
    %cst_9 = arith.constant 5.000000e-05 : f32
    %cst_10 = arith.constant 5.000000e-05 : f32
    %7 = arith.mulf %cst_9, %cst_10 : f32
    %8 = vector.broadcast %7 : f32 to vector<2x128x1xf32>
    %9 = arith.maximumf %6, %8 : vector<2x128x1xf32>
    %10 = math.rsqrt %9 : vector<2x128x1xf32>
    %11 = vector.broadcast %10 : vector<2x128x1xf32> to vector<2x128x4xf32>
    %12 = arith.mulf %1, %11 : vector<2x128x4xf32>
    %13 = vector.extract_strided_slice %1 {offsets = [0, 0, 0], sizes = [1, 128, 4], strides = [1, 1, 1]} : vector<2x128x4xf32> to vector<1x128x4xf32>
    %14 = vector.shape_cast %13 : vector<1x128x4xf32> to vector<128x4xf32>
    %15 = arith.truncf %14 : vector<128x4xf32> to vector<128x4xbf16>
    %16 = vector.extract_strided_slice %12 {offsets = [0, 0, 0], sizes = [1, 128, 4], strides = [1, 1, 1]} : vector<2x128x4xf32> to vector<1x128x4xf32>
    %17 = vector.shape_cast %16 : vector<1x128x4xf32> to vector<128x4xf32>
    %18 = arith.truncf %17 : vector<128x4xf32> to vector<128x4xbf16>
    %cst_11 = arith.constant dense<0.000000e+00> : vector<128x128xf32>
    %19 = tpu.matmul %18, %15, %cst_11 {dimension_numbers = #tpu.dot_dimension_numbers<[1], [1], [0], [0], [0, 0, 1, 0], [], []>} : vector<128x4xbf16>, vector<128x4xbf16>, vector<128x128xf32> -> vector<128x128xf32>
    %20 = vector.extract_strided_slice %12 {offsets = [1, 0, 0], sizes = [1, 128, 4], strides = [1, 1, 1]} : vector<2x128x4xf32> to vector<1x128x4xf32>
    %21 = vector.shape_cast %20 : vector<1x128x4xf32> to vector<128x4xf32>
    %22 = arith.truncf %21 : vector<128x4xf32> to vector<128x4xbf16>
    %cst_12 = arith.constant dense<0.000000e+00> : vector<128x128xf32>
    %23 = tpu.matmul %22, %15, %cst_12 {dimension_numbers = #tpu.dot_dimension_numbers<[1], [1], [0], [0], [0, 0, 1, 0], [], []>} : vector<128x4xbf16>, vector<128x4xbf16>, vector<128x128xf32> -> vector<128x128xf32>
    %24 = vector.extract_strided_slice %12 {offsets = [1, 0, 0], sizes = [1, 128, 4], strides = [1, 1, 1]} : vector<2x128x4xf32> to vector<1x128x4xf32>
    %25 = vector.shape_cast %24 : vector<1x128x4xf32> to vector<128x4xf32>
    %26 = arith.truncf %25 : vector<128x4xf32> to vector<128x4xbf16>
    %cst_13 = arith.constant dense<0.000000e+00> : vector<128x128xf32>
    %27 = tpu.matmul %26, %15, %cst_13 {dimension_numbers = #tpu.dot_dimension_numbers<[1], [1], [0], [0], [0, 0, 1, 0], [], []>} : vector<128x4xbf16>, vector<128x4xbf16>, vector<128x128xf32> -> vector<128x128xf32>
    %cst_14 = arith.constant dense<0xFF800000> : vector<128xf32>
    %28 = vector.multi_reduction <maximumf>, %19, %cst_14 [0] : vector<128x128xf32> to vector<128xf32>
    %29 = vector.shape_cast %28 : vector<128xf32> to vector<1x128xf32>
    %cst_15 = arith.constant dense<0xFF800000> : vector<128xf32>
    %30 = vector.multi_reduction <maximumf>, %23, %cst_15 [0] : vector<128x128xf32> to vector<128xf32>
    %31 = vector.shape_cast %30 : vector<128xf32> to vector<1x128xf32>
    %32 = arith.maximumf %29, %31 : vector<1x128xf32>
    %cst_16 = arith.constant dense<0xFF800000> : vector<128xf32>
    %33 = vector.multi_reduction <maximumf>, %27, %cst_16 [0] : vector<128x128xf32> to vector<128xf32>
    %34 = vector.shape_cast %33 : vector<128xf32> to vector<1x128xf32>
    %35 = arith.maximumf %32, %34 : vector<1x128xf32>
    %36 = vector.broadcast %35 : vector<1x128xf32> to vector<128x128xf32>
    %37 = arith.subf %19, %36 : vector<128x128xf32>
    %38 = math.exp %37 : vector<128x128xf32>
    %39 = vector.broadcast %35 : vector<1x128xf32> to vector<128x128xf32>
    %40 = arith.subf %23, %39 : vector<128x128xf32>
    %41 = math.exp %40 : vector<128x128xf32>
    %42 = vector.broadcast %35 : vector<1x128xf32> to vector<128x128xf32>
    %43 = arith.subf %27, %42 : vector<128x128xf32>
    %44 = math.exp %43 : vector<128x128xf32>
    %cst_17 = arith.constant dense<0.000000e+00> : vector<128xf32>
    %45 = vector.multi_reduction <add>, %38, %cst_17 [0] : vector<128x128xf32> to vector<128xf32>
    %46 = vector.shape_cast %45 : vector<128xf32> to vector<1x128xf32>
    %cst_18 = arith.constant dense<0.000000e+00> : vector<128xf32>
    %47 = vector.multi_reduction <add>, %41, %cst_18 [0] : vector<128x128xf32> to vector<128xf32>
    %48 = vector.shape_cast %47 : vector<128xf32> to vector<1x128xf32>
    %49 = arith.addf %46, %48 : vector<1x128xf32>
    %cst_19 = arith.constant dense<0.000000e+00> : vector<128xf32>
    %50 = vector.multi_reduction <add>, %44, %cst_19 [0] : vector<128x128xf32> to vector<128xf32>
    %51 = vector.shape_cast %50 : vector<128xf32> to vector<1x128xf32>
    %52 = arith.addf %49, %51 : vector<1x128xf32>
    %53 = vector.extract_strided_slice %3 {offsets = [0, 0, 0], sizes = [1, 128, 16], strides = [1, 1, 1]} : vector<2x128x16xf32> to vector<1x128x16xf32>
    %54 = vector.shape_cast %53 : vector<1x128x16xf32> to vector<128x16xf32>
    %55 = arith.truncf %54 : vector<128x16xf32> to vector<128x16xbf16>
    %56 = arith.truncf %38 : vector<128x128xf32> to vector<128x128xbf16>
    %cst_20 = arith.constant dense<0.000000e+00> : vector<16x128xf32>
    %57 = tpu.matmul %55, %56, %cst_20 {dimension_numbers = #tpu.dot_dimension_numbers<[0], [0], [1], [1], [0, 1, 1, 1], [], []>} : vector<128x16xbf16>, vector<128x128xbf16>, vector<16x128xf32> -> vector<16x128xf32>
    %58 = vector.extract_strided_slice %3 {offsets = [1, 0, 0], sizes = [1, 128, 16], strides = [1, 1, 1]} : vector<2x128x16xf32> to vector<1x128x16xf32>
    %59 = vector.shape_cast %58 : vector<1x128x16xf32> to vector<128x16xf32>
    %60 = arith.truncf %59 : vector<128x16xf32> to vector<128x16xbf16>
    %61 = arith.truncf %41 : vector<128x128xf32> to vector<128x128xbf16>
    %cst_21 = arith.constant dense<0.000000e+00> : vector<16x128xf32>
    %62 = tpu.matmul %60, %61, %cst_21 {dimension_numbers = #tpu.dot_dimension_numbers<[0], [0], [1], [1], [0, 1, 1, 1], [], []>} : vector<128x16xbf16>, vector<128x128xbf16>, vector<16x128xf32> -> vector<16x128xf32>
    %63 = arith.addf %57, %62 : vector<16x128xf32>
    %64 = vector.extract_strided_slice %3 {offsets = [1, 0, 0], sizes = [1, 128, 16], strides = [1, 1, 1]} : vector<2x128x16xf32> to vector<1x128x16xf32>
    %65 = vector.shape_cast %64 : vector<1x128x16xf32> to vector<128x16xf32>
    %66 = arith.truncf %65 : vector<128x16xf32> to vector<128x16xbf16>
    %67 = arith.truncf %44 : vector<128x128xf32> to vector<128x128xbf16>
    %cst_22 = arith.constant dense<0.000000e+00> : vector<16x128xf32>
    %68 = tpu.matmul %66, %67, %cst_22 {dimension_numbers = #tpu.dot_dimension_numbers<[0], [0], [1], [1], [0, 1, 1, 1], [], []>} : vector<128x16xbf16>, vector<128x128xbf16>, vector<16x128xf32> -> vector<16x128xf32>
    %69 = arith.addf %63, %68 : vector<16x128xf32>
    %70 = tpu.reciprocal %52 {approx = true} : vector<1x128xf32> -> vector<1x128xf32>
    %71 = vector.broadcast %70 : vector<1x128xf32> to vector<16x128xf32>
    %72 = arith.mulf %69, %71 : vector<16x128xf32>
    %73 = math.log %52 : vector<1x128xf32>
    %74 = arith.addf %35, %73 : vector<1x128xf32>
    %c0_23 = arith.constant 0 : index
    %c0_24 = arith.constant 0 : index
    %c0_25 = arith.constant 0 : index
    %c0_26 = arith.constant 0 : index
    %75 = vector.load %arg4[%c0_23, %c0_24, %c0_25, %c0_26] : memref<1x1x16x256xf32, #tpu.memory_space<vmem>>, vector<1x1x16x128xf32>
    %76 = vector.shape_cast %75 : vector<1x1x16x128xf32> to vector<16x128xf32>
    %77 = vector.shape_cast %72 : vector<16x128xf32> to vector<1x1x16x128xf32>
    tpu.vector_store %arg4[%c0_23, %c0_24, %c0_25, %c0_26], %77 {strides = array<i32>} : memref<1x1x16x256xf32, #tpu.memory_space<vmem>>, vector<1x1x16x128xf32>,
    %c0_27 = arith.constant 0 : index
    %c0_28 = arith.constant 0 : index
    %c0_29 = arith.constant 0 : index
    %c0_30 = arith.constant 0 : index
    %78 = vector.load %arg5[%c0_27, %c0_28, %c0_29, %c0_30] : memref<1x1x2x128xf32, #tpu.memory_space<vmem>>, vector<1x1x1x128xf32>
    %79 = vector.shape_cast %78 : vector<1x1x1x128xf32> to vector<1x128xf32>
    %80 = vector.shape_cast %74 : vector<1x128xf32> to vector<1x1x1x128xf32>
    tpu.vector_store %arg5[%c0_27, %c0_28, %c0_29, %c0_30], %80 {strides = array<i32>} : memref<1x1x2x128xf32, #tpu.memory_space<vmem>>, vector<1x1x1x128xf32>,
    %81 = vector.extract_strided_slice %1 {offsets = [1, 0, 0], sizes = [1, 128, 4], strides = [1, 1, 1]} : vector<2x128x4xf32> to vector<1x128x4xf32>
    %82 = vector.shape_cast %81 : vector<1x128x4xf32> to vector<128x4xf32>
    %83 = arith.truncf %82 : vector<128x4xf32> to vector<128x4xbf16>
    %84 = vector.extract_strided_slice %12 {offsets = [1, 0, 0], sizes = [1, 128, 4], strides = [1, 1, 1]} : vector<2x128x4xf32> to vector<1x128x4xf32>
    %85 = vector.shape_cast %84 : vector<1x128x4xf32> to vector<128x4xf32>
    %86 = arith.truncf %85 : vector<128x4xf32> to vector<128x4xbf16>
    %cst_31 = arith.constant dense<0.000000e+00> : vector<128x128xf32>
    %87 = tpu.matmul %86, %83, %cst_31 {dimension_numbers = #tpu.dot_dimension_numbers<[1], [1], [0], [0], [0, 0, 1, 0], [], []>} : vector<128x4xbf16>, vector<128x4xbf16>, vector<128x128xf32> -> vector<128x128xf32>
    %88 = vector.extract_strided_slice %12 {offsets = [0, 0, 0], sizes = [1, 128, 4], strides = [1, 1, 1]} : vector<2x128x4xf32> to vector<1x128x4xf32>
    %89 = vector.shape_cast %88 : vector<1x128x4xf32> to vector<128x4xf32>
    %90 = arith.truncf %89 : vector<128x4xf32> to vector<128x4xbf16>
    %cst_32 = arith.constant dense<0.000000e+00> : vector<128x128xf32>
    %91 = tpu.matmul %90, %83, %cst_32 {dimension_numbers = #tpu.dot_dimension_numbers<[1], [1], [0], [0], [0, 0, 1, 0], [], []>} : vector<128x4xbf16>, vector<128x4xbf16>, vector<128x128xf32> -> vector<128x128xf32>
    %92 = vector.extract_strided_slice %12 {offsets = [0, 0, 0], sizes = [1, 128, 4], strides = [1, 1, 1]} : vector<2x128x4xf32> to vector<1x128x4xf32>
    %93 = vector.shape_cast %92 : vector<1x128x4xf32> to vector<128x4xf32>
    %94 = arith.truncf %93 : vector<128x4xf32> to vector<128x4xbf16>
    %cst_33 = arith.constant dense<0.000000e+00> : vector<128x128xf32>
    %95 = tpu.matmul %94, %83, %cst_33 {dimension_numbers = #tpu.dot_dimension_numbers<[1], [1], [0], [0], [0, 0, 1, 0], [], []>} : vector<128x4xbf16>, vector<128x4xbf16>, vector<128x128xf32> -> vector<128x128xf32>
    %cst_34 = arith.constant dense<0xFF800000> : vector<128xf32>
    %96 = vector.multi_reduction <maximumf>, %87, %cst_34 [0] : vector<128x128xf32> to vector<128xf32>
    %97 = vector.shape_cast %96 : vector<128xf32> to vector<1x128xf32>
    %cst_35 = arith.constant dense<0xFF800000> : vector<128xf32>
    %98 = vector.multi_reduction <maximumf>, %91, %cst_35 [0] : vector<128x128xf32> to vector<128xf32>
    %99 = vector.shape_cast %98 : vector<128xf32> to vector<1x128xf32>
    %100 = arith.maximumf %97, %99 : vector<1x128xf32>
    %cst_36 = arith.constant dense<0xFF800000> : vector<128xf32>
    %101 = vector.multi_reduction <maximumf>, %95, %cst_36 [0] : vector<128x128xf32> to vector<128xf32>
    %102 = vector.shape_cast %101 : vector<128xf32> to vector<1x128xf32>
    %103 = arith.maximumf %100, %102 : vector<1x128xf32>
    %104 = vector.broadcast %103 : vector<1x128xf32> to vector<128x128xf32>
    %105 = arith.subf %87, %104 : vector<128x128xf32>
    %106 = math.exp %105 : vector<128x128xf32>
    %107 = vector.broadcast %103 : vector<1x128xf32> to vector<128x128xf32>
    %108 = arith.subf %91, %107 : vector<128x128xf32>
    %109 = math.exp %108 : vector<128x128xf32>
    %110 = vector.broadcast %103 : vector<1x128xf32> to vector<128x128xf32>
    %111 = arith.subf %95, %110 : vector<128x128xf32>
    %112 = math.exp %111 : vector<128x128xf32>
    %cst_37 = arith.constant dense<0.000000e+00> : vector<128xf32>
    %113 = vector.multi_reduction <add>, %106, %cst_37 [0] : vector<128x128xf32> to vector<128xf32>
    %114 = vector.shape_cast %113 : vector<128xf32> to vector<1x128xf32>
    %cst_38 = arith.constant dense<0.000000e+00> : vector<128xf32>
    %115 = vector.multi_reduction <add>, %109, %cst_38 [0] : vector<128x128xf32> to vector<128xf32>
    %116 = vector.shape_cast %115 : vector<128xf32> to vector<1x128xf32>
    %117 = arith.addf %114, %116 : vector<1x128xf32>
    %cst_39 = arith.constant dense<0.000000e+00> : vector<128xf32>
    %118 = vector.multi_reduction <add>, %112, %cst_39 [0] : vector<128x128xf32> to vector<128xf32>
    %119 = vector.shape_cast %118 : vector<128xf32> to vector<1x128xf32>
    %120 = arith.addf %117, %119 : vector<1x128xf32>
    %121 = vector.extract_strided_slice %3 {offsets = [1, 0, 0], sizes = [1, 128, 16], strides = [1, 1, 1]} : vector<2x128x16xf32> to vector<1x128x16xf32>
    %122 = vector.shape_cast %121 : vector<1x128x16xf32> to vector<128x16xf32>
    %123 = arith.truncf %122 : vector<128x16xf32> to vector<128x16xbf16>
    %124 = arith.truncf %106 : vector<128x128xf32> to vector<128x128xbf16>
    %cst_40 = arith.constant dense<0.000000e+00> : vector<16x128xf32>
    %125 = tpu.matmul %123, %124, %cst_40 {dimension_numbers = #tpu.dot_dimension_numbers<[0], [0], [1], [1], [0, 1, 1, 1], [], []>} : vector<128x16xbf16>, vector<128x128xbf16>, vector<16x128xf32> -> vector<16x128xf32>
    %126 = vector.extract_strided_slice %3 {offsets = [0, 0, 0], sizes = [1, 128, 16], strides = [1, 1, 1]} : vector<2x128x16xf32> to vector<1x128x16xf32>
    %127 = vector.shape_cast %126 : vector<1x128x16xf32> to vector<128x16xf32>
    %128 = arith.truncf %127 : vector<128x16xf32> to vector<128x16xbf16>
    %129 = arith.truncf %109 : vector<128x128xf32> to vector<128x128xbf16>
    %cst_41 = arith.constant dense<0.000000e+00> : vector<16x128xf32>
    %130 = tpu.matmul %128, %129, %cst_41 {dimension_numbers = #tpu.dot_dimension_numbers<[0], [0], [1], [1], [0, 1, 1, 1], [], []>} : vector<128x16xbf16>, vector<128x128xbf16>, vector<16x128xf32> -> vector<16x128xf32>
    %131 = arith.addf %125, %130 : vector<16x128xf32>
    %132 = vector.extract_strided_slice %3 {offsets = [0, 0, 0], sizes = [1, 128, 16], strides = [1, 1, 1]} : vector<2x128x16xf32> to vector<1x128x16xf32>
    %133 = vector.shape_cast %132 : vector<1x128x16xf32> to vector<128x16xf32>
    %134 = arith.truncf %133 : vector<128x16xf32> to vector<128x16xbf16>
    %135 = arith.truncf %112 : vector<128x128xf32> to vector<128x128xbf16>
    %cst_42 = arith.constant dense<0.000000e+00> : vector<16x128xf32>
    %136 = tpu.matmul %134, %135, %cst_42 {dimension_numbers = #tpu.dot_dimension_numbers<[0], [0], [1], [1], [0, 1, 1, 1], [], []>} : vector<128x16xbf16>, vector<128x128xbf16>, vector<16x128xf32> -> vector<16x128xf32>
    %137 = arith.addf %131, %136 : vector<16x128xf32>
    %138 = tpu.reciprocal %120 {approx = true} : vector<1x128xf32> -> vector<1x128xf32>
    %139 = vector.broadcast %138 : vector<1x128xf32> to vector<16x128xf32>
    %140 = arith.mulf %137, %139 : vector<16x128xf32>
    %141 = math.log %120 : vector<1x128xf32>
    %142 = arith.addf %103, %141 : vector<1x128xf32>
    %c0_43 = arith.constant 0 : index
    %c0_44 = arith.constant 0 : index
    %c0_45 = arith.constant 0 : index
    %c128 = arith.constant 128 : index
    %143 = vector.load %arg4[%c0_43, %c0_44, %c0_45, %c128] : memref<1x1x16x256xf32, #tpu.memory_space<vmem>>, vector<1x1x16x128xf32>
    %144 = vector.shape_cast %143 : vector<1x1x16x128xf32> to vector<16x128xf32>
    %145 = vector.shape_cast %140 : vector<16x128xf32> to vector<1x1x16x128xf32>
    tpu.vector_store %arg4[%c0_43, %c0_44, %c0_45, %c128], %145 {strides = array<i32>} : memref<1x1x16x256xf32, #tpu.memory_space<vmem>>, vector<1x1x16x128xf32>,
    %c0_46 = arith.constant 0 : index
    %c0_47 = arith.constant 0 : index
    %c1 = arith.constant 1 : index
    %c0_48 = arith.constant 0 : index
    %146 = vector.load %arg5[%c0_46, %c0_47, %c1, %c0_48] : memref<1x1x2x128xf32, #tpu.memory_space<vmem>>, vector<1x1x1x128xf32>
    %147 = vector.shape_cast %146 : vector<1x1x1x128xf32> to vector<1x128xf32>
    %148 = vector.shape_cast %142 : vector<1x128xf32> to vector<1x1x1x128xf32>
    tpu.vector_store %arg5[%c0_46, %c0_47, %c1, %c0_48], %148 {strides = array<i32>} : memref<1x1x2x128xf32, #tpu.memory_space<vmem>>, vector<1x1x1x128xf32>,
    return
  }
  func.func @transform_0(%arg0: i32, %arg1: i32) -> (i32, i32, i32, i32, i32) {
    %c0_i32 = arith.constant 0 : i32
    %c0_i32_0 = arith.constant 0 : i32
    %c0_i32_1 = arith.constant 0 : i32
    %c0_i32_2 = arith.constant 0 : i32
    return %arg0, %arg1, %c0_i32, %c0_i32_0, %c0_i32_1 : i32, i32, i32, i32, i32
  }
  func.func @transform_1(%arg0: i32, %arg1: i32) -> (i32, i32, i32, i32, i32) {
    %c0_i32 = arith.constant 0 : i32
    %c0_i32_0 = arith.constant 0 : i32
    %c0_i32_1 = arith.constant 0 : i32
    %c0_i32_2 = arith.constant 0 : i32
    return %arg0, %arg1, %c0_i32, %c0_i32_0, %c0_i32_1 : i32, i32, i32, i32, i32
  }
  func.func @transform_2(%arg0: i32, %arg1: i32) -> (i32, i32, i32, i32) {
    %c0_i32 = arith.constant 0 : i32
    %c0_i32_0 = arith.constant 0 : i32
    %c0_i32_1 = arith.constant 0 : i32
    return %arg0, %arg1, %c0_i32, %c0_i32_0 : i32, i32, i32, i32
  }
  func.func @transform_3(%arg0: i32, %arg1: i32) -> (i32, i32, i32, i32) {
    %c0_i32 = arith.constant 0 : i32
    %c0_i32_0 = arith.constant 0 : i32
    %c0_i32_1 = arith.constant 0 : i32
    return %arg0, %arg1, %c0_i32, %c0_i32_0 : i32, i32, i32, i32
  }
}

</mosaic_0001>

<llo_original>
// kernel: tpu_custom_call.1
$region0: #{tpu_custom_call.1}
  #allocation0 [shape = 'u32[]', space=smem, size = 0x4, offset = 0x4, fixed_abs, tag = 'smem constant byte address 0x4 - core index']
  #allocation1 [shape = 'u32[144,128]{1,0:T(1,128)}', space=vmem, size = 0x12000, scoped, tag = 'internal scratch']
  %s0 = inlined_call_operand.vmem [shape: f32[2,4,2,128,4], index: 0, kind: input, shape index: {}]
  %s1 = inlined_call_operand.vmem [shape: f32[2,4,2,128,16], index: 1, kind: input, shape index: {}]
  %s2 = inlined_call_operand.hbm [shape: f32[2,4,16,256], index: 2, kind: output, shape index: {0}]
  %s3 = inlined_call_operand.hbm [shape: f32[2,4,2,128], index: 3, kind: output, shape index: {1}]
  %4 = xla_tuple %s2, %s3
  %s5 = sld [smem:[#allocation0]]
  $region49: #{tpu_custom_call.1} parent=0
    _
  %s7 = ssub.s32 1, %s5
  %s8 = scalar_select 0, %s7, %s5
  $region1: #{tpu_custom_call.1} parent=0
    #allocation2 [shape = 'u8[32768]{0}', space=vmem, size = 0x8000, scoped, tag = 'output window, operand 0']
    #allocation3 [shape = 's32[2]{0}', space=sflag, size = 0x8, scoped, tag = 'scoped memory for tpu_custom_call.1']
    #allocation4 [shape = 'u8[2048]{0}', space=vmem, size = 0x800, scoped, tag = 'output window, operand 1']
    #allocation5 [shape = 's32[2]{0}', space=sflag, size = 0x8, scoped, tag = 'scoped memory for tpu_custom_call.1']
    %9 = vsyncpa [#allocation3], 0
    %s10 = scalar_lea.sflag [#allocation3], 1
    %11 = vsyncpa %s10, 0
    %12 = vsyncpa [#allocation5], 0
    %s13 = scalar_lea.sflag [#allocation5], 1
    %14 = vsyncpa %s13, 0
    loop: start=0, step=1, limit=10
    $region2: #{tpu_custom_call.1} parent=1 // loop_pre_header
      _
    $region3: #{tpu_custom_call.1} parent=1 // loop_header
      %s16 = sphi 0, %s20
      %p17 = scmp.ge.s32.totalorder %s16, 10
      %s23 = sphi 0, %s35
      %s24 = sphi 0, %s31
      %s25 = sphi 0, %s23
      %s26 = sphi 0, %s24
      %s27 = sphi 0, %s25
      %s28 = sphi 0, %s26
      %s40 = sphi 0, %s42
      %s43 = sphi 0, %s40
      %s44 = sphi 0, %s43
      %s60 = sphi 0, %s44
      %s68 = sphi 0, %s70
      %s71 = sphi 0, %s68
      %s72 = sphi 0, %s71
      %s88 = sphi 0, %s72
      %s96 = sphi 0, %s98
      %s99 = sphi 0, %s96
      %s100 = sphi 0, %s99
      %s116 = sphi 0, %s100
      %s124 = sphi 0, %s126
      %s127 = sphi 0, %s124
      %s128 = sphi 0, %s127
      %s144 = sphi 0, %s128
    $region4: #{tpu_custom_call.1} parent=1 // loop_header_branch
      %19 = sbr.rel (%p17) target = $region8
    $region5: #{tpu_custom_call.1} parent=1 // loop_body
      %s21 = ssub.s32 %s16, 1
      %s22 = ssub.s32 %s16, 2
      %s29 = sadd.s32 1, %s24
      %p30 = scmp.ge.s32.totalorder %s29, 4
      %s31 = scalar_select %p30, 0, %s29
      %s32 = sadd.s32 1, %s23
      %s33 = scalar_select %p30, %s32, %s23
      %p34 = scmp.ge.s32.totalorder %s33, 2
      %s35 = scalar_select %p34, 0, %s33
      %s36 = ssub.s32 %s23, %s35
      %s37 = ssub.s32 %s24, %s31
      %s38 = sor.u32 %s36, %s37
      %p39 = scmp.eq.s32.totalorder %s38, 0
      %s41 = sadd.s32 %s40, 1
      %s42 = scalar_select %p39, %s40, %s41
      %p45 = pneg %p39
      %p46 = scmp.eq.s32.totalorder %s16, 7
      %p47 = por %p45, %p46
      %p48 = scmp.ne.s32.totalorder %s40, %s43
      %p49 = scmp.eq.s32.totalorder %s16, 0
      %p50 = por %p48, %p49
      %p51 = scmp.ne.s32.totalorder %s40, %s43
      %p52 = scmp.eq.s32.totalorder %s21, 7
      %p53 = por %p51, %p52
      %p54 = scmp.ne.s32.totalorder %s43, %s44
      %p55 = scmp.eq.s32.totalorder %s21, 0
      %p56 = por %p54, %p55
      %p57 = scmp.ne.s32.totalorder %s43, %s44
      %p58 = scmp.eq.s32.totalorder %s22, 7
      %p59 = por %p57, %p58
      %p61 = scmp.ne.s32.totalorder %s44, %s60
      %p62 = scmp.eq.s32.totalorder %s22, 0
      %p63 = por %p61, %p62
      %s64 = ssub.s32 %s23, %s35
      %s65 = ssub.s32 %s24, %s31
      %s66 = sor.u32 %s64, %s65
      %p67 = scmp.eq.s32.totalorder %s66, 0
      %s69 = sadd.s32 %s68, 1
      %s70 = scalar_select %p67, %s68, %s69
      %p73 = pneg %p67
      %p74 = scmp.eq.s32.totalorder %s16, 7
      %p75 = por %p73, %p74
      %p76 = scmp.ne.s32.totalorder %s68, %s71
      %p77 = scmp.eq.s32.totalorder %s16, 0
      %p78 = por %p76, %p77
      %p79 = scmp.ne.s32.totalorder %s68, %s71
      %p80 = scmp.eq.s32.totalorder %s21, 7
      %p81 = por %p79, %p80
      %p82 = scmp.ne.s32.totalorder %s71, %s72
      %p83 = scmp.eq.s32.totalorder %s21, 0
      %p84 = por %p82, %p83
      %p85 = scmp.ne.s32.totalorder %s71, %s72
      %p86 = scmp.eq.s32.totalorder %s22, 7
      %p87 = por %p85, %p86
      %p89 = scmp.ne.s32.totalorder %s72, %s88
      %p90 = scmp.eq.s32.totalorder %s22, 0
      %p91 = por %p89, %p90
      %s92 = ssub.s32 %s23, %s35
      %s93 = ssub.s32 %s24, %s31
      %s94 = sor.u32 %s92, %s93
      %p95 = scmp.eq.s32.totalorder %s94, 0
      %s97 = sadd.s32 %s96, 1
      %s98 = scalar_select %p95, %s96, %s97
      %p101 = pneg %p95
      %p102 = scmp.eq.s32.totalorder %s16, 7
      %p103 = por %p101, %p102
      %p104 = scmp.ne.s32.totalorder %s96, %s99
      %p105 = scmp.eq.s32.totalorder %s16, 0
      %p106 = por %p104, %p105
      %p107 = scmp.ne.s32.totalorder %s96, %s99
      %p108 = scmp.eq.s32.totalorder %s21, 7
      %p109 = por %p107, %p108
      %p110 = scmp.ne.s32.totalorder %s99, %s100
      %p111 = scmp.eq.s32.totalorder %s21, 0
      %p112 = por %p110, %p111
      %p113 = scmp.ne.s32.totalorder %s99, %s100
      %p114 = scmp.eq.s32.totalorder %s22, 7
      %p115 = por %p113, %p114
      %p117 = scmp.ne.s32.totalorder %s100, %s116
      %p118 = scmp.eq.s32.totalorder %s22, 0
      %p119 = por %p117, %p118
      %s120 = ssub.s32 %s23, %s35
      %s121 = ssub.s32 %s24, %s31
      %s122 = sor.u32 %s120, %s121
      %p123 = scmp.eq.s32.totalorder %s122, 0
      %s125 = sadd.s32 %s124, 1
      %s126 = scalar_select %p123, %s124, %s125
      %p129 = pneg %p123
      %p130 = scmp.eq.s32.totalorder %s16, 7
      %p131 = por %p129, %p130
      %p132 = scmp.ne.s32.totalorder %s124, %s127
      %p133 = scmp.eq.s32.totalorder %s16, 0
      %p134 = por %p132, %p133
      %p135 = scmp.ne.s32.totalorder %s124, %s127
      %p136 = scmp.eq.s32.totalorder %s21, 7
      %p137 = por %p135, %p136
      %p138 = scmp.ne.s32.totalorder %s127, %s128
      %p139 = scmp.eq.s32.totalorder %s21, 0
      %p140 = por %p138, %p139
      %p141 = scmp.ne.s32.totalorder %s127, %s128
      %p142 = scmp.eq.s32.totalorder %s22, 7
      %p143 = por %p141, %p142
      %p145 = scmp.ne.s32.totalorder %s128, %s144
      %p146 = scmp.eq.s32.totalorder %s22, 0
      %p147 = por %p145, %p146
      %p148 = scmp.le.s32.totalorder 1, %s16
      %p149 = scmp.lt.s32.totalorder %s16, 9
      %p150 = pnand %p148, %p149
      %p151 = pneg %p150
      // Predicated region
      $region9: #{tpu_custom_call.1} parent=5 // pred_check
        _
      $region10: #{tpu_custom_call.1} parent=5 // pred_check_branch
        %153 = sbr.rel (%p150) target = $region12
      $region11: #{tpu_custom_call.1} parent=5 // pred_region
        %s154 = ssub.s32 %s16, 1
      $region12: #{tpu_custom_call.1} parent=5 // pred_fallthru
        _
      %p155 = scmp.lt.s32.totalorder %s16, 8
      // Predicated region
      $region13: #{tpu_custom_call.1} parent=5 // pred_check
        %p156 = pneg %p155
      $region14: #{tpu_custom_call.1} parent=5 // pred_check_branch
        %158 = sbr.rel (%p156) target = $region16
      $region15: #{tpu_custom_call.1} parent=5 // pred_region
        // Predicated region
        $region17: #{tpu_custom_call.1} parent=15 // pred_check
          %p159 = pneg %p50
        $region18: #{tpu_custom_call.1} parent=15 // pred_check_branch
          %161 = sbr.rel (%p159) target = $region20
        $region19: #{tpu_custom_call.1} parent=15 // pred_region
          %p162 = scmp.lt.s32.totalorder %s23, 1
          %s163 = scalar_select %p162, %s23, 1
          %p164 = scmp.lt.s32.totalorder %s24, 3
          %s165 = scalar_select %p164, %s24, 3
          %s166 = smul.addr %s165, 32
          %s167 = smul.addr %s163, 128
          %s168 = sadd.s32 %s166, %s167
          %s169 = smul.addr %s168, 8
          %s170 = scalar_lea.vmem %s0, %s169
        $region20: #{tpu_custom_call.1} parent=15 // pred_fallthru
          _
        // Predicated region
        $region21: #{tpu_custom_call.1} parent=15 // pred_check
          %p171 = pneg %p78
        $region22: #{tpu_custom_call.1} parent=15 // pred_check_branch
          %173 = sbr.rel (%p171) target = $region24
        $region23: #{tpu_custom_call.1} parent=15 // pred_region
          %p174 = scmp.lt.s32.totalorder %s23, 1
          %s175 = scalar_select %p174, %s23, 1
          %p176 = scmp.lt.s32.totalorder %s24, 3
          %s177 = scalar_select %p176, %s24, 3
          %s178 = smul.addr %s177, 32
          %s179 = smul.addr %s175, 128
          %s180 = sadd.s32 %s178, %s179
          %s181 = smul.addr %s180, 8
          %s182 = scalar_lea.vmem %s1, %s181
        $region24: #{tpu_custom_call.1} parent=15 // pred_fallthru
          _
      $region16: #{tpu_custom_call.1} parent=5 // pred_fallthru
        _
      %p183 = scmp.le.s32.totalorder 1, %s16
      %p184 = scmp.lt.s32.totalorder %s16, 9
      %p185 = pnand %p183, %p184
      %p186 = pneg %p185
      // Predicated region
      $region25: #{tpu_custom_call.1} parent=5 // pred_check
        _
      $region26: #{tpu_custom_call.1} parent=5 // pred_check_branch
        %188 = sbr.rel (%p185) target = $region28
      $region27: #{tpu_custom_call.1} parent=5 // pred_region
        %s189 = ssub.s32 %s16, 1
        %p190 = scmp.lt.s32.totalorder %s25, 1
        %s191 = scalar_select %p190, %s25, 1
        %p192 = scmp.lt.s32.totalorder %s26, 3
        %s193 = scalar_select %p192, %s26, 3
        %s194 = smul.addr %s193, 32
        %s195 = smul.addr %s191, 128
        %s196 = sadd.s32 %s194, %s195
        %s197 = smul.addr %s196, 8
        %s198 = scalar_lea.vmem %s0, %s197
        %p199 = pneg %p56
        %p200 = pneg %p53
        %p201 = scmp.lt.s32.totalorder %s25, 1
        %s202 = scalar_select %p201, %s25, 1
        %p203 = scmp.lt.s32.totalorder %s26, 3
        %s204 = scalar_select %p203, %s26, 3
        %s205 = smul.addr %s204, 32
        %s206 = smul.addr %s202, 128
        %s207 = sadd.s32 %s205, %s206
        %s208 = smul.addr %s207, 8
        %s209 = scalar_lea.vmem %s1, %s208
        %p210 = pneg %p84
        %p211 = pneg %p81
        %p212 = pneg %p112
        %p213 = pneg %p109
        %s214 = sand.u32 %s99, 1
        %s215 = scalar_lea.sflag [#allocation3], %s214
        %s216 = sand.u32 %s99, 1
        %s217 = smul.addr %s216, 32
        %s218 = scalar_lea.vmem [#allocation2], %s217
        %p219 = pneg %p140
        %p220 = pneg %p137
        %s221 = sand.u32 %s127, 1
        %s222 = scalar_lea.sflag [#allocation5], %s221
        %s223 = sand.u32 %s127, 1
        %s224 = smul.addr %s223, 2
        %s225 = scalar_lea.vmem [#allocation4], %s224
        %p226 = scmp.lt.s32.totalorder %s25, 1
        %s227 = scalar_select %p226, %s25, 1
        %p228 = scmp.lt.s32.totalorder %s26, 3
        %s229 = scalar_select %p228, %s26, 3
        %s230 = smul.addr %s229, 32
        %s231 = smul.addr %s227, 128
        %s232 = sadd.s32 %s230, %s231
        %s233 = smul.addr %s232, 8
        %s234 = scalar_lea.vmem %s0, %s233
        %p235 = scmp.lt.s32.totalorder %s25, 1
        %s236 = scalar_select %p235, %s25, 1
        %p237 = scmp.lt.s32.totalorder %s26, 3
        %s238 = scalar_select %p237, %s26, 3
        %s239 = smul.addr %s238, 32
        %s240 = smul.addr %s236, 128
        %s241 = sadd.s32 %s239, %s240
        %s242 = smul.addr %s241, 8
        %s243 = scalar_lea.vmem %s1, %s242
        %v245 = vld [vmem:[%s234] sm:$0xff]
        %v246 = vld [vmem:[%s234 + $0x8] sm:$0xff]
        %v247 = vld [vmem:[%s234 + $0x10] sm:$0xff]
        %v248 = vld [vmem:[%s234 + $0x18] sm:$0xff]
        %v249 = vld [vmem:[%s234 + $0x20] sm:$0xff]
        %v250 = vld [vmem:[%s234 + $0x28] sm:$0xff]
        %v251 = vld [vmem:[%s234 + $0x30] sm:$0xff]
        %v252 = vld [vmem:[%s234 + $0x38] sm:$0xff]
        %v253 = vld [vmem:[%s234 + $0x40] sm:$0xff]
        %v254 = vld [vmem:[%s234 + $0x48] sm:$0xff]
        %v255 = vld [vmem:[%s234 + $0x50] sm:$0xff]
        %v256 = vld [vmem:[%s234 + $0x58] sm:$0xff]
        %v257 = vld [vmem:[%s234 + $0x60] sm:$0xff]
        %v258 = vld [vmem:[%s234 + $0x68] sm:$0xff]
        %v259 = vld [vmem:[%s234 + $0x70] sm:$0xff]
        %v260 = vld [vmem:[%s234 + $0x78] sm:$0xff]
        %v261 = vld [vmem:[%s234 + $0x80] sm:$0xff]
        %v262 = vld [vmem:[%s234 + $0x88] sm:$0xff]
        %v263 = vld [vmem:[%s234 + $0x90] sm:$0xff]
        %v264 = vld [vmem:[%s234 + $0x98] sm:$0xff]
        %v265 = vld [vmem:[%s234 + $0xa0] sm:$0xff]
        %v266 = vld [vmem:[%s234 + $0xa8] sm:$0xff]
        %v267 = vld [vmem:[%s234 + $0xb0] sm:$0xff]
        %v268 = vld [vmem:[%s234 + $0xb8] sm:$0xff]
        %v269 = vld [vmem:[%s234 + $0xc0] sm:$0xff]
        %v270 = vld [vmem:[%s234 + $0xc8] sm:$0xff]
        %v271 = vld [vmem:[%s234 + $0xd0] sm:$0xff]
        %v272 = vld [vmem:[%s234 + $0xd8] sm:$0xff]
        %v273 = vld [vmem:[%s234 + $0xe0] sm:$0xff]
        %v274 = vld [vmem:[%s234 + $0xe8] sm:$0xff]
        %v275 = vld [vmem:[%s234 + $0xf0] sm:$0xff]
        %v276 = vld [vmem:[%s234 + $0xf8] sm:$0xff]
        %v277 = vld [vmem:[%s243] sm:$0xff]
        %v278 = vld [vmem:[%s243 + $0x8] sm:$0xff]
        %v279 = vld [vmem:[%s243 + $0x10] sm:$0xff]
        %v280 = vld [vmem:[%s243 + $0x18] sm:$0xff]
        %v281 = vld [vmem:[%s243 + $0x20] sm:$0xff]
        %v282 = vld [vmem:[%s243 + $0x28] sm:$0xff]
        %v283 = vld [vmem:[%s243 + $0x30] sm:$0xff]
        %v284 = vld [vmem:[%s243 + $0x38] sm:$0xff]
        %v285 = vld [vmem:[%s243 + $0x40] sm:$0xff]
        %v286 = vld [vmem:[%s243 + $0x48] sm:$0xff]
        %v287 = vld [vmem:[%s243 + $0x50] sm:$0xff]
        %v288 = vld [vmem:[%s243 + $0x58] sm:$0xff]
        %v289 = vld [vmem:[%s243 + $0x60] sm:$0xff]
        %v290 = vld [vmem:[%s243 + $0x68] sm:$0xff]
        %v291 = vld [vmem:[%s243 + $0x70] sm:$0xff]
        %v292 = vld [vmem:[%s243 + $0x78] sm:$0xff]
        %v293 = vld [vmem:[%s243 + $0x80] sm:$0xff]
        %v294 = vld [vmem:[%s243 + $0x88] sm:$0xff]
        %v295 = vld [vmem:[%s243 + $0x90] sm:$0xff]
        %v296 = vld [vmem:[%s243 + $0x98] sm:$0xff]
        %v297 = vld [vmem:[%s243 + $0xa0] sm:$0xff]
        %v298 = vld [vmem:[%s243 + $0xa8] sm:$0xff]
        %v299 = vld [vmem:[%s243 + $0xb0] sm:$0xff]
        %v300 = vld [vmem:[%s243 + $0xb8] sm:$0xff]
        %v301 = vld [vmem:[%s243 + $0xc0] sm:$0xff]
        %v302 = vld [vmem:[%s243 + $0xc8] sm:$0xff]
        %v303 = vld [vmem:[%s243 + $0xd0] sm:$0xff]
        %v304 = vld [vmem:[%s243 + $0xd8] sm:$0xff]
        %v305 = vld [vmem:[%s243 + $0xe0] sm:$0xff]
        %v306 = vld [vmem:[%s243 + $0xe8] sm:$0xff]
        %v307 = vld [vmem:[%s243 + $0xf0] sm:$0xff]
        %v308 = vld [vmem:[%s243 + $0xf8] sm:$0xff]
        %v309 = vmul.f32 %v245, %v245
        %v310 = vmul.f32 %v246, %v246
        %v311 = vmul.f32 %v247, %v247
        %v312 = vmul.f32 %v248, %v248
        %v313 = vmul.f32 %v249, %v249
        %v314 = vmul.f32 %v250, %v250
        %v315 = vmul.f32 %v251, %v251
        %v316 = vmul.f32 %v252, %v252
        %v317 = vmul.f32 %v253, %v253
        %v318 = vmul.f32 %v254, %v254
        %v319 = vmul.f32 %v255, %v255
        %v320 = vmul.f32 %v256, %v256
        %v321 = vmul.f32 %v257, %v257
        %v322 = vmul.f32 %v258, %v258
        %v323 = vmul.f32 %v259, %v259
        %v324 = vmul.f32 %v260, %v260
        %v325 = vmul.f32 %v261, %v261
        %v326 = vmul.f32 %v262, %v262
        %v327 = vmul.f32 %v263, %v263
        %v328 = vmul.f32 %v264, %v264
        %v329 = vmul.f32 %v265, %v265
        %v330 = vmul.f32 %v266, %v266
        %v331 = vmul.f32 %v267, %v267
        %v332 = vmul.f32 %v268, %v268
        %v333 = vmul.f32 %v269, %v269
        %v334 = vmul.f32 %v270, %v270
        %v335 = vmul.f32 %v271, %v271
        %v336 = vmul.f32 %v272, %v272
        %v337 = vmul.f32 %v273, %v273
        %v338 = vmul.f32 %v274, %v274
        %v339 = vmul.f32 %v275, %v275
        %v340 = vmul.f32 %v276, %v276
        %vm341 = vcmask 31744
        %v342 = vsel %vm341, %v309, 0.0
        %343 = vadd.xlane.f32.xlu0 %v342
        %v344 = vpop.xlane.xlu0 %343
        %v345 = vsel %vm341, %v310, 0.0
        %346 = vadd.xlane.f32.xlu0 %v345
        %v347 = vpop.xlane.xlu0 %346
        %v348 = vsel %vm341, %v311, 0.0
        %349 = vadd.xlane.f32.xlu0 %v348
        %v350 = vpop.xlane.xlu0 %349
        %v351 = vsel %vm341, %v312, 0.0
        %352 = vadd.xlane.f32.xlu0 %v351
        %v353 = vpop.xlane.xlu0 %352
        %v354 = vsel %vm341, %v313, 0.0
        %355 = vadd.xlane.f32.xlu0 %v354
        %v356 = vpop.xlane.xlu0 %355
        %v357 = vsel %vm341, %v314, 0.0
        %358 = vadd.xlane.f32.xlu0 %v357
        %v359 = vpop.xlane.xlu0 %358
        %v360 = vsel %vm341, %v315, 0.0
        %361 = vadd.xlane.f32.xlu0 %v360
        %v362 = vpop.xlane.xlu0 %361
        %v363 = vsel %vm341, %v316, 0.0
        %364 = vadd.xlane.f32.xlu0 %v363
        %v365 = vpop.xlane.xlu0 %364
        %v366 = vsel %vm341, %v317, 0.0
        %367 = vadd.xlane.f32.xlu0 %v366
        %v368 = vpop.xlane.xlu0 %367
        %v369 = vsel %vm341, %v318, 0.0
        %370 = vadd.xlane.f32.xlu0 %v369
        %v371 = vpop.xlane.xlu0 %370
        %v372 = vsel %vm341, %v319, 0.0
        %373 = vadd.xlane.f32.xlu0 %v372
        %v374 = vpop.xlane.xlu0 %373
        %v375 = vsel %vm341, %v320, 0.0
        %376 = vadd.xlane.f32.xlu0 %v375
        %v377 = vpop.xlane.xlu0 %376
        %v378 = vsel %vm341, %v321, 0.0
        %379 = vadd.xlane.f32.xlu0 %v378
        %v380 = vpop.xlane.xlu0 %379
        %v381 = vsel %vm341, %v322, 0.0
        %382 = vadd.xlane.f32.xlu0 %v381
        %v383 = vpop.xlane.xlu0 %382
        %v384 = vsel %vm341, %v323, 0.0
        %385 = vadd.xlane.f32.xlu0 %v384
        %v386 = vpop.xlane.xlu0 %385
        %v387 = vsel %vm341, %v324, 0.0
        %388 = vadd.xlane.f32.xlu0 %v387
        %v389 = vpop.xlane.xlu0 %388
        %v390 = vsel %vm341, %v325, 0.0
        %391 = vadd.xlane.f32.xlu0 %v390
        %v392 = vpop.xlane.xlu0 %391
        %v393 = vsel %vm341, %v326, 0.0
        %394 = vadd.xlane.f32.xlu0 %v393
        %v395 = vpop.xlane.xlu0 %394
        %v396 = vsel %vm341, %v327, 0.0
        %397 = vadd.xlane.f32.xlu0 %v396
        %v398 = vpop.xlane.xlu0 %397
        %v399 = vsel %vm341, %v328, 0.0
        %400 = vadd.xlane.f32.xlu0 %v399
        %v401 = vpop.xlane.xlu0 %400
        %v402 = vsel %vm341, %v329, 0.0
        %403 = vadd.xlane.f32.xlu0 %v402
        %v404 = vpop.xlane.xlu0 %403
        %v405 = vsel %vm341, %v330, 0.0
        %406 = vadd.xlane.f32.xlu0 %v405
        %v407 = vpop.xlane.xlu0 %406
        %v408 = vsel %vm341, %v331, 0.0
        %409 = vadd.xlane.f32.xlu0 %v408
        %v410 = vpop.xlane.xlu0 %409
        %v411 = vsel %vm341, %v332, 0.0
        %412 = vadd.xlane.f32.xlu0 %v411
        %v413 = vpop.xlane.xlu0 %412
        %v414 = vsel %vm341, %v333, 0.0
        %415 = vadd.xlane.f32.xlu0 %v414
        %v416 = vpop.xlane.xlu0 %415
        %v417 = vsel %vm341, %v334, 0.0
        %418 = vadd.xlane.f32.xlu0 %v417
        %v419 = vpop.xlane.xlu0 %418
        %v420 = vsel %vm341, %v335, 0.0
        %421 = vadd.xlane.f32.xlu0 %v420
        %v422 = vpop.xlane.xlu0 %421
        %v423 = vsel %vm341, %v336, 0.0
        %424 = vadd.xlane.f32.xlu0 %v423
        %v425 = vpop.xlane.xlu0 %424
        %v426 = vsel %vm341, %v337, 0.0
        %427 = vadd.xlane.f32.xlu0 %v426
        %v428 = vpop.xlane.xlu0 %427
        %v429 = vsel %vm341, %v338, 0.0
        %430 = vadd.xlane.f32.xlu0 %v429
        %v431 = vpop.xlane.xlu0 %430
        %v432 = vsel %vm341, %v339, 0.0
        %433 = vadd.xlane.f32.xlu0 %v432
        %v434 = vpop.xlane.xlu0 %433
        %v435 = vsel %vm341, %v340, 0.0
        %436 = vadd.xlane.f32.xlu0 %v435
        %v437 = vpop.xlane.xlu0 %436
        %v438 = vmax.f32 %v344, 2.4999998e-09
        %v439 = vmax.f32 %v347, 2.4999998e-09
        %v440 = vmax.f32 %v350, 2.4999998e-09
        %v441 = vmax.f32 %v353, 2.4999998e-09
        %v442 = vmax.f32 %v356, 2.4999998e-09
        %v443 = vmax.f32 %v359, 2.4999998e-09
        %v444 = vmax.f32 %v362, 2.4999998e-09
        %v445 = vmax.f32 %v365, 2.4999998e-09
        %v446 = vmax.f32 %v368, 2.4999998e-09
        %v447 = vmax.f32 %v371, 2.4999998e-09
        %v448 = vmax.f32 %v374, 2.4999998e-09
        %v449 = vmax.f32 %v377, 2.4999998e-09
        %v450 = vmax.f32 %v380, 2.4999998e-09
        %v451 = vmax.f32 %v383, 2.4999998e-09
        %v452 = vmax.f32 %v386, 2.4999998e-09
        %v453 = vmax.f32 %v389, 2.4999998e-09
        %v454 = vmax.f32 %v392, 2.4999998e-09
        %v455 = vmax.f32 %v395, 2.4999998e-09
        %v456 = vmax.f32 %v398, 2.4999998e-09
        %v457 = vmax.f32 %v401, 2.4999998e-09
        %v458 = vmax.f32 %v404, 2.4999998e-09
        %v459 = vmax.f32 %v407, 2.4999998e-09
        %v460 = vmax.f32 %v410, 2.4999998e-09
        %v461 = vmax.f32 %v413, 2.4999998e-09
        %v462 = vmax.f32 %v416, 2.4999998e-09
        %v463 = vmax.f32 %v419, 2.4999998e-09
        %v464 = vmax.f32 %v422, 2.4999998e-09
        %v465 = vmax.f32 %v425, 2.4999998e-09
        %v466 = vmax.f32 %v428, 2.4999998e-09
        %v467 = vmax.f32 %v431, 2.4999998e-09
        %v468 = vmax.f32 %v434, 2.4999998e-09
        %v469 = vmax.f32 %v437, 2.4999998e-09
        %v470 = vrsqrt.pop %v438
        %v471 = vrsqrt.pop %v439
        %v472 = vrsqrt.pop %v440
        %v473 = vrsqrt.pop %v441
        %v474 = vrsqrt.pop %v442
        %v475 = vrsqrt.pop %v443
        %v476 = vrsqrt.pop %v444
        %v477 = vrsqrt.pop %v445
        %v478 = vrsqrt.pop %v446
        %v479 = vrsqrt.pop %v447
        %v480 = vrsqrt.pop %v448
        %v481 = vrsqrt.pop %v449
        %v482 = vrsqrt.pop %v450
        %v483 = vrsqrt.pop %v451
        %v484 = vrsqrt.pop %v452
        %v485 = vrsqrt.pop %v453
        %v486 = vrsqrt.pop %v454
        %v487 = vrsqrt.pop %v455
        %v488 = vrsqrt.pop %v456
        %v489 = vrsqrt.pop %v457
        %v490 = vrsqrt.pop %v458
        %v491 = vrsqrt.pop %v459
        %v492 = vrsqrt.pop %v460
        %v493 = vrsqrt.pop %v461
        %v494 = vrsqrt.pop %v462
        %v495 = vrsqrt.pop %v463
        %v496 = vrsqrt.pop %v464
        %v497 = vrsqrt.pop %v465
        %v498 = vrsqrt.pop %v466
        %v499 = vrsqrt.pop %v467
        %v500 = vrsqrt.pop %v468
        %v501 = vrsqrt.pop %v469
        %v502 = vmul.f32 %v245, %v470
        %v503 = vmul.f32 %v246, %v471
        %v504 = vmul.f32 %v247, %v472
        %v505 = vmul.f32 %v248, %v473
        %v506 = vmul.f32 %v249, %v474
        %v507 = vmul.f32 %v250, %v475
        %v508 = vmul.f32 %v251, %v476
        %v509 = vmul.f32 %v252, %v477
        %v510 = vmul.f32 %v253, %v478
        %v511 = vmul.f32 %v254, %v479
        %v512 = vmul.f32 %v255, %v480
        %v513 = vmul.f32 %v256, %v481
        %v514 = vmul.f32 %v257, %v482
        %v515 = vmul.f32 %v258, %v483
        %v516 = vmul.f32 %v259, %v484
        %v517 = vmul.f32 %v260, %v485
        %v518 = vmul.f32 %v261, %v486
        %v519 = vmul.f32 %v262, %v487
        %v520 = vmul.f32 %v263, %v488
        %v521 = vmul.f32 %v264, %v489
        %v522 = vmul.f32 %v265, %v490
        %v523 = vmul.f32 %v266, %v491
        %v524 = vmul.f32 %v267, %v492
        %v525 = vmul.f32 %v268, %v493
        %v526 = vmul.f32 %v269, %v494
        %v527 = vmul.f32 %v270, %v495
        %v528 = vmul.f32 %v271, %v496
        %v529 = vmul.f32 %v272, %v497
        %v530 = vmul.f32 %v273, %v498
        %v531 = vmul.f32 %v274, %v499
        %v532 = vmul.f32 %v275, %v500
        %v533 = vmul.f32 %v276, %v501
        %v534 = vpack.c.bf16 %v246, %v245
        %v535 = vpack.c.bf16 %v248, %v247
        %v536 = vpack.c.bf16 %v250, %v249
        %v537 = vpack.c.bf16 %v252, %v251
        %v538 = vpack.c.bf16 %v254, %v253
        %v539 = vpack.c.bf16 %v256, %v255
        %v540 = vpack.c.bf16 %v258, %v257
        %v541 = vpack.c.bf16 %v260, %v259
        %v542 = vpack.c.bf16 %v503, %v502
        %v543 = vpack.c.bf16 %v505, %v504
        %v544 = vpack.c.bf16 %v507, %v506
        %v545 = vpack.c.bf16 %v509, %v508
        %v546 = vpack.c.bf16 %v511, %v510
        %v547 = vpack.c.bf16 %v513, %v512
        %v548 = vpack.c.bf16 %v515, %v514
        %v549 = vpack.c.bf16 %v517, %v516
        %v551 = vsel %vm341, %v542, 0
        %v554 = vsel %vm341, %v543, 0
        %v557 = vsel %vm341, %v544, 0
        %v560 = vsel %vm341, %v545, 0
        %v563 = vsel %vm341, %v546, 0
        %v566 = vsel %vm341, %v547, 0
        %v569 = vsel %vm341, %v548, 0
        %v572 = vsel %vm341, %v549, 0
        %v575 = vsel %vm341, %v534, 0
        %v578 = vsel %vm341, %v535, 0
        %v581 = vsel %vm341, %v536, 0
        %v584 = vsel %vm341, %v537, 0
        %v587 = vsel %vm341, %v538, 0
        %v590 = vsel %vm341, %v539, 0
        %v593 = vsel %vm341, %v540, 0
        %v596 = vsel %vm341, %v541, 0
        %598 = vmatprep.subr.bf16.mxu0 0
        %599 = vmatpush1.bf16.xpose.msra.mxu0 %v575
        %600 = vmatprep.subr.bf16.mxu0 0
        %601 = vmatpush1.bf16.xpose.msra.mxu0 %v578
        %602 = vmatprep.subr.bf16.mxu0 0
        %603 = vmatpush1.bf16.xpose.msra.mxu0 %v581
        %604 = vmatprep.subr.bf16.mxu0 0
        %605 = vmatpush1.bf16.xpose.msra.mxu0 %v584
        %606 = vmatprep.subr.bf16.mxu0 0
        %607 = vmatpush1.bf16.xpose.msra.mxu0 %v587
        %608 = vmatprep.subr.bf16.mxu0 0
        %609 = vmatpush1.bf16.xpose.msra.mxu0 %v590
        %610 = vmatprep.subr.bf16.mxu0 0
        %611 = vmatpush1.bf16.xpose.msra.mxu0 %v593
        %612 = vmatprep.subr.bf16.mxu0 0
        %613 = vmatpush1.bf16.xpose.msra.mxu0 %v596
        %614 = vmatprep.subr.bf16.mxu0 0
        %615 = vmatpush1.bf16.xpose.msra.mxu0 0
        %616 = vmatprep.subr.bf16.mxu0 0
        %617 = vmatpush1.bf16.xpose.msra.mxu0 0
        %618 = vmatprep.subr.bf16.mxu0 0
        %619 = vmatpush1.bf16.xpose.msra.mxu0 0
        %620 = vmatprep.subr.bf16.mxu0 0
        %621 = vmatpush1.bf16.xpose.msra.mxu0 0
        %622 = vmatprep.subr.bf16.mxu0 0
        %623 = vmatpush1.bf16.xpose.msra.mxu0 0
        %624 = vmatprep.subr.bf16.mxu0 0
        %625 = vmatpush1.bf16.xpose.msra.mxu0 0
        %626 = vmatprep.subr.bf16.mxu0 0
        %627 = vmatpush1.bf16.xpose.msra.mxu0 0
        %628 = vmatprep.subr.bf16.mxu0 0
        %629 = vmatpush1.bf16.xpose.msra.mxu0 0
        %630 = vmatprep.mubr.bf16.mxu0 0
        %631 = vmatmul.mubr.bf16.gmra.mrb[0].mxu0 %v551
        %v632 = vpop.f32.mrb[0].mxu0
        %v633 = vadd.f32 0.0, %v632
        %v634 = vpop.f32.mrb[0].mxu0
        %v635 = vpop.f32.mrb[0].mxu0
        %v636 = vadd.f32 0.0, %v635
        %v637 = vpop.f32.mrb[0].mxu0
        %638 = vmatprep.mubr.bf16.mxu0 0
        %639 = vmatmul.mubr.bf16.gmra.mrb[0].mxu0 %v554
        %v640 = vpop.f32.mrb[0].mxu0
        %v641 = vadd.f32 0.0, %v640
        %v642 = vpop.f32.mrb[0].mxu0
        %v643 = vpop.f32.mrb[0].mxu0
        %v644 = vadd.f32 0.0, %v643
        %v645 = vpop.f32.mrb[0].mxu0
        %646 = vmatprep.mubr.bf16.mxu0 0
        %647 = vmatmul.mubr.bf16.gmra.mrb[0].mxu0 %v557
        %v648 = vpop.f32.mrb[0].mxu0
        %v649 = vadd.f32 0.0, %v648
        %v650 = vpop.f32.mrb[0].mxu0
        %v651 = vpop.f32.mrb[0].mxu0
        %v652 = vadd.f32 0.0, %v651
        %v653 = vpop.f32.mrb[0].mxu0
        %654 = vmatprep.mubr.bf16.mxu0 0
        %655 = vmatmul.mubr.bf16.gmra.mrb[0].mxu0 %v560
        %v656 = vpop.f32.mrb[0].mxu0
        %v657 = vadd.f32 0.0, %v656
        %v658 = vpop.f32.mrb[0].mxu0
        %v659 = vpop.f32.mrb[0].mxu0
        %v660 = vadd.f32 0.0, %v659
        %v661 = vpop.f32.mrb[0].mxu0
        %662 = vmatprep.mubr.bf16.mxu0 0
        %663 = vmatmul.mubr.bf16.gmra.mrb[0].mxu0 %v563
        %v664 = vpop.f32.mrb[0].mxu0
        %v665 = vadd.f32 0.0, %v664
        %v666 = vpop.f32.mrb[0].mxu0
        %v667 = vpop.f32.mrb[0].mxu0
        %v668 = vadd.f32 0.0, %v667
        %v669 = vpop.f32.mrb[0].mxu0
        %670 = vmatprep.mubr.bf16.mxu0 0
        %671 = vmatmul.mubr.bf16.gmra.mrb[0].mxu0 %v566
        %v672 = vpop.f32.mrb[0].mxu0
        %v673 = vadd.f32 0.0, %v672
        %v674 = vpop.f32.mrb[0].mxu0
        %v675 = vpop.f32.mrb[0].mxu0
        %v676 = vadd.f32 0.0, %v675
        %v677 = vpop.f32.mrb[0].mxu0
        %678 = vmatprep.mubr.bf16.mxu0 0
        %679 = vmatmul.mubr.bf16.gmra.mrb[0].mxu0 %v569
        %v680 = vpop.f32.mrb[0].mxu0
        %v681 = vadd.f32 0.0, %v680
        %v682 = vpop.f32.mrb[0].mxu0
        %v683 = vpop.f32.mrb[0].mxu0
        %v684 = vadd.f32 0.0, %v683
        %v685 = vpop.f32.mrb[0].mxu0
        %686 = vmatprep.mubr.bf16.mxu0 0
        %687 = vmatmul.mubr.bf16.gmra.mrb[0].mxu0 %v572
        %v688 = vpop.f32.mrb[0].mxu0
        %v689 = vadd.f32 0.0, %v688
        %v690 = vpop.f32.mrb[0].mxu0
        %v691 = vpop.f32.mrb[0].mxu0
        %v692 = vadd.f32 0.0, %v691
        %v693 = vpop.f32.mrb[0].mxu0
        %694 = vdwg.mxu0
        %v695 = vpack.c.bf16 %v519, %v518
        %v696 = vpack.c.bf16 %v521, %v520
        %v697 = vpack.c.bf16 %v523, %v522
        %v698 = vpack.c.bf16 %v525, %v524
        %v699 = vpack.c.bf16 %v527, %v526
        %v700 = vpack.c.bf16 %v529, %v528
        %v701 = vpack.c.bf16 %v531, %v530
        %v702 = vpack.c.bf16 %v533, %v532
        %v704 = vsel %vm341, %v695, 0
        %v707 = vsel %vm341, %v696, 0
        %v710 = vsel %vm341, %v697, 0
        %v713 = vsel %vm341, %v698, 0
        %v716 = vsel %vm341, %v699, 0
        %v719 = vsel %vm341, %v700, 0
        %v722 = vsel %vm341, %v701, 0
        %v725 = vsel %vm341, %v702, 0
        %727 = vmatprep.subr.bf16.mxu0 0
        %728 = vmatpush1.bf16.xpose.msra.mxu0 %v575
        %729 = vmatprep.subr.bf16.mxu0 0
        %730 = vmatpush1.bf16.xpose.msra.mxu0 %v578
        %731 = vmatprep.subr.bf16.mxu0 0
        %732 = vmatpush1.bf16.xpose.msra.mxu0 %v581
        %733 = vmatprep.subr.bf16.mxu0 0
        %734 = vmatpush1.bf16.xpose.msra.mxu0 %v584
        %735 = vmatprep.subr.bf16.mxu0 0
        %736 = vmatpush1.bf16.xpose.msra.mxu0 %v587
        %737 = vmatprep.subr.bf16.mxu0 0
        %738 = vmatpush1.bf16.xpose.msra.mxu0 %v590
        %739 = vmatprep.subr.bf16.mxu0 0
        %740 = vmatpush1.bf16.xpose.msra.mxu0 %v593
        %741 = vmatprep.subr.bf16.mxu0 0
        %742 = vmatpush1.bf16.xpose.msra.mxu0 %v596
        %743 = vmatprep.subr.bf16.mxu0 0
        %744 = vmatpush1.bf16.xpose.msra.mxu0 0
        %745 = vmatprep.subr.bf16.mxu0 0
        %746 = vmatpush1.bf16.xpose.msra.mxu0 0
        %747 = vmatprep.subr.bf16.mxu0 0
        %748 = vmatpush1.bf16.xpose.msra.mxu0 0
        %749 = vmatprep.subr.bf16.mxu0 0
        %750 = vmatpush1.bf16.xpose.msra.mxu0 0
        %751 = vmatprep.subr.bf16.mxu0 0
        %752 = vmatpush1.bf16.xpose.msra.mxu0 0
        %753 = vmatprep.subr.bf16.mxu0 0
        %754 = vmatpush1.bf16.xpose.msra.mxu0 0
        %755 = vmatprep.subr.bf16.mxu0 0
        %756 = vmatpush1.bf16.xpose.msra.mxu0 0
        %757 = vmatprep.subr.bf16.mxu0 0
        %758 = vmatpush1.bf16.xpose.msra.mxu0 0
        %759 = vmatprep.mubr.bf16.mxu0 0
        %760 = vmatmul.mubr.bf16.gmra.mrb[0].mxu0 %v704
        %v761 = vpop.f32.mrb[0].mxu0
        %v762 = vadd.f32 0.0, %v761
        %v763 = vpop.f32.mrb[0].mxu0
        %v764 = vpop.f32.mrb[0].mxu0
        %v765 = vadd.f32 0.0, %v764
        %v766 = vpop.f32.mrb[0].mxu0
        %767 = vmatprep.mubr.bf16.mxu0 0
        %768 = vmatmul.mubr.bf16.gmra.mrb[0].mxu0 %v707
        %v769 = vpop.f32.mrb[0].mxu0
        %v770 = vadd.f32 0.0, %v769
        %v771 = vpop.f32.mrb[0].mxu0
        %v772 = vpop.f32.mrb[0].mxu0
        %v773 = vadd.f32 0.0, %v772
        %v774 = vpop.f32.mrb[0].mxu0
        %775 = vmatprep.mubr.bf16.mxu0 0
        %776 = vmatmul.mubr.bf16.gmra.mrb[0].mxu0 %v710
        %v777 = vpop.f32.mrb[0].mxu0
        %v778 = vadd.f32 0.0, %v777
        %v779 = vpop.f32.mrb[0].mxu0
        %v780 = vpop.f32.mrb[0].mxu0
        %v781 = vadd.f32 0.0, %v780
        %v782 = vpop.f32.mrb[0].mxu0
        %783 = vmatprep.mubr.bf16.mxu0 0
        %784 = vmatmul.mubr.bf16.gmra.mrb[0].mxu0 %v713
        %v785 = vpop.f32.mrb[0].mxu0
        %v786 = vadd.f32 0.0, %v785
        %v787 = vpop.f32.mrb[0].mxu0
        %v788 = vpop.f32.mrb[0].mxu0
        %v789 = vadd.f32 0.0, %v788
        %v790 = vpop.f32.mrb[0].mxu0
        %791 = vmatprep.mubr.bf16.mxu0 0
        %792 = vmatmul.mubr.bf16.gmra.mrb[0].mxu0 %v716
        %v793 = vpop.f32.mrb[0].mxu0
        %v794 = vadd.f32 0.0, %v793
        %v795 = vpop.f32.mrb[0].mxu0
        %v796 = vpop.f32.mrb[0].mxu0
        %v797 = vadd.f32 0.0, %v796
        %v798 = vpop.f32.mrb[0].mxu0
        %799 = vmatprep.mubr.bf16.mxu0 0
        %800 = vmatmul.mubr.bf16.gmra.mrb[0].mxu0 %v719
        %v801 = vpop.f32.mrb[0].mxu0
        %v802 = vadd.f32 0.0, %v801
        %v803 = vpop.f32.mrb[0].mxu0
        %v804 = vpop.f32.mrb[0].mxu0
        %v805 = vadd.f32 0.0, %v804
        %v806 = vpop.f32.mrb[0].mxu0
        %807 = vmatprep.mubr.bf16.mxu0 0
        %808 = vmatmul.mubr.bf16.gmra.mrb[0].mxu0 %v722
        %v809 = vpop.f32.mrb[0].mxu0
        %v810 = vadd.f32 0.0, %v809
        %v811 = vpop.f32.mrb[0].mxu0
        %v812 = vpop.f32.mrb[0].mxu0
        %v813 = vadd.f32 0.0, %v812
        %v814 = vpop.f32.mrb[0].mxu0
        %815 = vmatprep.mubr.bf16.mxu0 0
        %816 = vmatmul.mubr.bf16.gmra.mrb[0].mxu0 %v725
        %v817 = vpop.f32.mrb[0].mxu0
        %v818 = vadd.f32 0.0, %v817
        %v819 = vpop.f32.mrb[0].mxu0
        %v820 = vpop.f32.mrb[0].mxu0
        %v821 = vadd.f32 0.0, %v820
        %v822 = vpop.f32.mrb[0].mxu0
        %823 = vdwg.mxu0
        %v824 = vmax.f32 %v633, %v649
        %v825 = vmax.f32 %v636, %v652
        %v826 = vmax.f32 %v641, %v657
        %v827 = vmax.f32 %v644, %v660
        %v828 = vmax.f32 %v824, %v665
        %v829 = vmax.f32 %v825, %v668
        %v830 = vmax.f32 %v826, %v673
        %v831 = vmax.f32 %v827, %v676
        %v832 = vmax.f32 %v828, %v681
        %v833 = vmax.f32 %v829, %v684
        %v834 = vmax.f32 %v830, %v689
        %v835 = vmax.f32 %v831, %v692
        %v836 = vmax.f32 %v832, %v833
        %v837 = vmax.f32 %v834, %v835
        %v838 = vmax.f32 %v836, %v837
        %v839 = vrot.slane %v838, 4
        %v840 = vmax.f32 %v838, %v839
        %v841 = vrot.slane %v840, 2
        %v842 = vmax.f32 %v840, %v841
        %v843 = vrot.slane %v842, 1
        %v844 = vmax.f32 %v842, %v843
        %v845 = vmax.f32 %v762, %v778
        %v846 = vmax.f32 %v765, %v781
        %v847 = vmax.f32 %v770, %v786
        %v848 = vmax.f32 %v773, %v789
        %v849 = vmax.f32 %v845, %v794
        %v850 = vmax.f32 %v846, %v797
        %v851 = vmax.f32 %v847, %v802
        %v852 = vmax.f32 %v848, %v805
        %v853 = vmax.f32 %v849, %v810
        %v854 = vmax.f32 %v850, %v813
        %v855 = vmax.f32 %v851, %v818
        %v856 = vmax.f32 %v852, %v821
        %v857 = vmax.f32 %v853, %v854
        %v858 = vmax.f32 %v855, %v856
        %v859 = vmax.f32 %v857, %v858
        %v860 = vrot.slane %v859, 4
        %v861 = vmax.f32 %v859, %v860
        %v862 = vrot.slane %v861, 2
        %v863 = vmax.f32 %v861, %v862
        %v864 = vrot.slane %v863, 1
        %v865 = vmax.f32 %v863, %v864
        %v866 = vmax.f32 %v844, %v865
        %v867 = vmax.f32 %v866, %v865
        %v868 = vsub.f32 %v633, %v867
        %v869 = vsub.f32 %v636, %v867
        %v870 = vsub.f32 %v641, %v867
        %v871 = vsub.f32 %v644, %v867
        %v872 = vsub.f32 %v649, %v867
        %v873 = vsub.f32 %v652, %v867
        %v874 = vsub.f32 %v657, %v867
        %v875 = vsub.f32 %v660, %v867
        %v876 = vsub.f32 %v665, %v867
        %v877 = vsub.f32 %v668, %v867
        %v878 = vsub.f32 %v673, %v867
        %v879 = vsub.f32 %v676, %v867
        %v880 = vsub.f32 %v681, %v867
        %v881 = vsub.f32 %v684, %v867
        %v882 = vsub.f32 %v689, %v867
        %v883 = vsub.f32 %v692, %v867
        %v884 = vmul.f32 %v868, 1.442695
        %v885 = vpow.pop %v884
        %v886 = vmul.f32 %v869, 1.442695
        %v887 = vpow.pop %v886
        %v888 = vmul.f32 %v870, 1.442695
        %v889 = vpow.pop %v888
        %v890 = vmul.f32 %v871, 1.442695
        %v891 = vpow.pop %v890
        %v892 = vmul.f32 %v872, 1.442695
        %v893 = vpow.pop %v892
        %v894 = vmul.f32 %v873, 1.442695
        %v895 = vpow.pop %v894
        %v896 = vmul.f32 %v874, 1.442695
        %v897 = vpow.pop %v896
        %v898 = vmul.f32 %v875, 1.442695
        %v899 = vpow.pop %v898
        %v900 = vmul.f32 %v876, 1.442695
        %v901 = vpow.pop %v900
        %v902 = vmul.f32 %v877, 1.442695
        %v903 = vpow.pop %v902
        %v904 = vmul.f32 %v878, 1.442695
        %v905 = vpow.pop %v904
        %v906 = vmul.f32 %v879, 1.442695
        %v907 = vpow.pop %v906
        %v908 = vmul.f32 %v880, 1.442695
        %v909 = vpow.pop %v908
        %v910 = vmul.f32 %v881, 1.442695
        %v911 = vpow.pop %v910
        %v912 = vmul.f32 %v882, 1.442695
        %v913 = vpow.pop %v912
        %v914 = vmul.f32 %v883, 1.442695
        %v915 = vpow.pop %v914
        %v916 = vsub.f32 %v762, %v867
        %v917 = vsub.f32 %v765, %v867
        %v918 = vsub.f32 %v770, %v867
        %v919 = vsub.f32 %v773, %v867
        %v920 = vsub.f32 %v778, %v867
        %v921 = vsub.f32 %v781, %v867
        %v922 = vsub.f32 %v786, %v867
        %v923 = vsub.f32 %v789, %v867
        %v924 = vsub.f32 %v794, %v867
        %v925 = vsub.f32 %v797, %v867
        %v926 = vsub.f32 %v802, %v867
        %v927 = vsub.f32 %v805, %v867
        %v928 = vsub.f32 %v810, %v867
        %v929 = vsub.f32 %v813, %v867
        %v930 = vsub.f32 %v818, %v867
        %v931 = vsub.f32 %v821, %v867
        %v932 = vmul.f32 %v916, 1.442695
        %v933 = vpow.pop %v932
        %v934 = vmul.f32 %v917, 1.442695
        %v935 = vpow.pop %v934
        %v936 = vmul.f32 %v918, 1.442695
        %v937 = vpow.pop %v936
        %v938 = vmul.f32 %v919, 1.442695
        %v939 = vpow.pop %v938
        %v940 = vmul.f32 %v920, 1.442695
        %v941 = vpow.pop %v940
        %v942 = vmul.f32 %v921, 1.442695
        %v943 = vpow.pop %v942
        %v944 = vmul.f32 %v922, 1.442695
        %v945 = vpow.pop %v944
        %v946 = vmul.f32 %v923, 1.442695
        %v947 = vpow.pop %v946
        %v948 = vmul.f32 %v924, 1.442695
        %v949 = vpow.pop %v948
        %v950 = vmul.f32 %v925, 1.442695
        %v951 = vpow.pop %v950
        %v952 = vmul.f32 %v926, 1.442695
        %v953 = vpow.pop %v952
        %v954 = vmul.f32 %v927, 1.442695
        %v955 = vpow.pop %v954
        %v956 = vmul.f32 %v928, 1.442695
        %v957 = vpow.pop %v956
        %v958 = vmul.f32 %v929, 1.442695
        %v959 = vpow.pop %v958
        %v960 = vmul.f32 %v930, 1.442695
        %v961 = vpow.pop %v960
        %v962 = vmul.f32 %v931, 1.442695
        %v963 = vpow.pop %v962
        %v964 = vadd.f32 %v885, %v887
        %v965 = vadd.f32 %v964, %v889
        %v966 = vadd.f32 %v965, %v891
        %v967 = vadd.f32 %v966, %v893
        %v968 = vadd.f32 %v967, %v895
        %v969 = vadd.f32 %v968, %v897
        %v970 = vadd.f32 %v969, %v899
        %v971 = vadd.f32 %v970, %v901
        %v972 = vadd.f32 %v971, %v903
        %v973 = vadd.f32 %v972, %v905
        %v974 = vadd.f32 %v973, %v907
        %v975 = vadd.f32 %v974, %v909
        %v976 = vadd.f32 %v975, %v911
        %v977 = vadd.f32 %v976, %v913
        %v978 = vadd.f32 %v977, %v915
        %v979 = vrot.slane %v978, 4
        %v980 = vadd.f32 %v978, %v979
        %v981 = vrot.slane %v980, 2
        %v982 = vadd.f32 %v980, %v981
        %v983 = vrot.slane %v982, 1
        %v984 = vadd.f32 %v982, %v983
        %v985 = vadd.f32 %v933, %v935
        %v986 = vadd.f32 %v985, %v937
        %v987 = vadd.f32 %v986, %v939
        %v988 = vadd.f32 %v987, %v941
        %v989 = vadd.f32 %v988, %v943
        %v990 = vadd.f32 %v989, %v945
        %v991 = vadd.f32 %v990, %v947
        %v992 = vadd.f32 %v991, %v949
        %v993 = vadd.f32 %v992, %v951
        %v994 = vadd.f32 %v993, %v953
        %v995 = vadd.f32 %v994, %v955
        %v996 = vadd.f32 %v995, %v957
        %v997 = vadd.f32 %v996, %v959
        %v998 = vadd.f32 %v997, %v961
        %v999 = vadd.f32 %v998, %v963
        %v1000 = vrot.slane %v999, 4
        %v1001 = vadd.f32 %v999, %v1000
        %v1002 = vrot.slane %v1001, 2
        %v1003 = vadd.f32 %v1001, %v1002
        %v1004 = vrot.slane %v1003, 1
        %v1005 = vadd.f32 %v1003, %v1004
        %v1006 = vadd.f32 %v984, %v1005
        %v1007 = vadd.f32 %v1006, %v1005
        %v1008 = vpack.c.bf16 %v278, %v277
        %v1009 = vpack.c.bf16 %v280, %v279
        %v1010 = vpack.c.bf16 %v282, %v281
        %v1011 = vpack.c.bf16 %v284, %v283
        %v1012 = vpack.c.bf16 %v286, %v285
        %v1013 = vpack.c.bf16 %v288, %v287
        %v1014 = vpack.c.bf16 %v290, %v289
        %v1015 = vpack.c.bf16 %v292, %v291
        %v1016 = vpack.c.bf16 %v887, %v885
        %v1017 = vpack.c.bf16 %v891, %v889
        %v1018 = vpack.c.bf16 %v895, %v893
        %v1019 = vpack.c.bf16 %v899, %v897
        %v1020 = vpack.c.bf16 %v903, %v901
        %v1021 = vpack.c.bf16 %v907, %v905
        %v1022 = vpack.c.bf16 %v911, %v909
        %v1023 = vpack.c.bf16 %v915, %v913
        %v1024 = vpack.c.bf16 %v294, %v293
        %v1025 = vpack.c.bf16 %v296, %v295
        %v1026 = vpack.c.bf16 %v298, %v297
        %v1027 = vpack.c.bf16 %v300, %v299
        %v1028 = vpack.c.bf16 %v302, %v301
        %v1029 = vpack.c.bf16 %v304, %v303
        %v1030 = vpack.c.bf16 %v306, %v305
        %v1031 = vpack.c.bf16 %v308, %v307
        %v1032 = vpack.c.bf16 %v935, %v933
        %v1033 = vpack.c.bf16 %v939, %v937
        %v1034 = vpack.c.bf16 %v943, %v941
        %v1035 = vpack.c.bf16 %v947, %v945
        %v1036 = vpack.c.bf16 %v951, %v949
        %v1037 = vpack.c.bf16 %v955, %v953
        %v1038 = vpack.c.bf16 %v959, %v957
        %v1039 = vpack.c.bf16 %v963, %v961
        %1040 = vxpose.xlu0.c.b16.start [1/8] %v1024, 128
        %1041 = vxpose.xlu0.c.b16.cont [2/8] %v1025, 128
        %1042 = vxpose.xlu0.c.b16.cont [3/8] %v1026, 128
        %1043 = vxpose.xlu0.c.b16.cont [4/8] %v1027, 128
        %1044 = vxpose.xlu0.c.b16.cont [5/8] %v1028, 128
        %1045 = vxpose.xlu0.c.b16.cont [6/8] %v1029, 128
        %1046 = vxpose.xlu0.c.b16.cont [7/8] %v1030, 128
        %1047 = vxpose.xlu0.c.b16.end [8/8] %v1031, 128
        %v1048 = vpop.trf.xlu0
        %v1049 = vpop.trf.xlu0
        %v1050 = vpop.trf.xlu0
        %v1051 = vpop.trf.xlu0
        %v1052 = vpop.trf.xlu0
        %v1053 = vpop.trf.xlu0
        %v1054 = vpop.trf.xlu0
        %v1055 = vpop.trf.xlu0
        %1056 = vmatprep.subr.bf16.mxu0 0
        %1057 = vmatpush1.bf16.msra.mxu0 %v1032
        %1058 = vmatprep.subr.bf16.mxu0 0
        %1059 = vmatpush1.bf16.msra.mxu0 %v1033
        %1060 = vmatprep.subr.bf16.mxu0 0
        %1061 = vmatpush1.bf16.msra.mxu0 %v1034
        %1062 = vmatprep.subr.bf16.mxu0 0
        %1063 = vmatpush1.bf16.msra.mxu0 %v1035
        %1064 = vmatprep.subr.bf16.mxu0 0
        %1065 = vmatpush1.bf16.msra.mxu0 %v1036
        %1066 = vmatprep.subr.bf16.mxu0 0
        %1067 = vmatpush1.bf16.msra.mxu0 %v1037
        %1068 = vmatprep.subr.bf16.mxu0 0
        %1069 = vmatpush1.bf16.msra.mxu0 %v1038
        %1070 = vmatprep.subr.bf16.mxu0 0
        %1071 = vmatpush1.bf16.msra.mxu0 %v1039
        %1072 = vmatprep.subr.bf16.mxu0 0
        %1073 = vmatpush1.bf16.msra.mxu0 0
        %1074 = vmatprep.subr.bf16.mxu0 0
        %1075 = vmatpush1.bf16.msra.mxu0 0
        %1076 = vmatprep.subr.bf16.mxu0 0
        %1077 = vmatpush1.bf16.msra.mxu0 0
        %1078 = vmatprep.subr.bf16.mxu0 0
        %1079 = vmatpush1.bf16.msra.mxu0 0
        %1080 = vmatprep.subr.bf16.mxu0 0
        %1081 = vmatpush1.bf16.msra.mxu0 0
        %1082 = vmatprep.subr.bf16.mxu0 0
        %1083 = vmatpush1.bf16.msra.mxu0 0
        %1084 = vmatprep.subr.bf16.mxu0 0
        %1085 = vmatpush1.bf16.msra.mxu0 0
        %1086 = vmatprep.subr.bf16.mxu0 0
        %1087 = vmatpush1.bf16.msra.mxu0 0
        %1088 = vmatprep.mubr.bf16.mxu0 0
        %1089 = vmatmul.mubr.bf16.gmra.mrb[0].mxu0 %v1048
        %v1090 = vpop.f32.mrb[0].mxu0
        %v1091 = vadd.f32 0.0, %v1090
        %v1092 = vpop.f32.mrb[0].mxu0
        %v1093 = vpop.f32.mrb[0].mxu0
        %v1094 = vadd.f32 0.0, %v1093
        %v1095 = vpop.f32.mrb[0].mxu0
        %1096 = vdwg.mxu0
        %1097 = vxpose.xlu0.c.b16.start [1/8] %v1008, 128
        %1098 = vxpose.xlu0.c.b16.cont [2/8] %v1009, 128
        %1099 = vxpose.xlu0.c.b16.cont [3/8] %v1010, 128
        %1100 = vxpose.xlu0.c.b16.cont [4/8] %v1011, 128
        %1101 = vxpose.xlu0.c.b16.cont [5/8] %v1012, 128
        %1102 = vxpose.xlu0.c.b16.cont [6/8] %v1013, 128
        %1103 = vxpose.xlu0.c.b16.cont [7/8] %v1014, 128
        %1104 = vxpose.xlu0.c.b16.end [8/8] %v1015, 128
        %v1105 = vpop.trf.xlu0
        %v1106 = vpop.trf.xlu0
        %v1107 = vpop.trf.xlu0
        %v1108 = vpop.trf.xlu0
        %v1109 = vpop.trf.xlu0
        %v1110 = vpop.trf.xlu0
        %v1111 = vpop.trf.xlu0
        %v1112 = vpop.trf.xlu0
        %1113 = vmatprep.subr.bf16.mxu0 0
        %1114 = vmatpush1.bf16.msra.mxu0 %v1016
        %1115 = vmatprep.subr.bf16.mxu0 0
        %1116 = vmatpush1.bf16.msra.mxu0 %v1017
        %1117 = vmatprep.subr.bf16.mxu0 0
        %1118 = vmatpush1.bf16.msra.mxu0 %v1018
        %1119 = vmatprep.subr.bf16.mxu0 0
        %1120 = vmatpush1.bf16.msra.mxu0 %v1019
        %1121 = vmatprep.subr.bf16.mxu0 0
        %1122 = vmatpush1.bf16.msra.mxu0 %v1020
        %1123 = vmatprep.subr.bf16.mxu0 0
        %1124 = vmatpush1.bf16.msra.mxu0 %v1021
        %1125 = vmatprep.subr.bf16.mxu0 0
        %1126 = vmatpush1.bf16.msra.mxu0 %v1022
        %1127 = vmatprep.subr.bf16.mxu0 0
        %1128 = vmatpush1.bf16.msra.mxu0 %v1023
        %1129 = vmatprep.subr.bf16.mxu0 0
        %1130 = vmatpush1.bf16.msra.mxu0 0
        %1131 = vmatprep.subr.bf16.mxu0 0
        %1132 = vmatpush1.bf16.msra.mxu0 0
        %1133 = vmatprep.subr.bf16.mxu0 0
        %1134 = vmatpush1.bf16.msra.mxu0 0
        %1135 = vmatprep.subr.bf16.mxu0 0
        %1136 = vmatpush1.bf16.msra.mxu0 0
        %1137 = vmatprep.subr.bf16.mxu0 0
        %1138 = vmatpush1.bf16.msra.mxu0 0
        %1139 = vmatprep.subr.bf16.mxu0 0
        %1140 = vmatpush1.bf16.msra.mxu0 0
        %1141 = vmatprep.subr.bf16.mxu0 0
        %1142 = vmatpush1.bf16.msra.mxu0 0
        %1143 = vmatprep.subr.bf16.mxu0 0
        %1144 = vmatpush1.bf16.msra.mxu0 0
        %1145 = vmatprep.mubr.bf16.mxu0 0
        %1146 = vmatmul.mubr.bf16.gmra.mrb[0].mxu0 %v1105
        %v1147 = vpop.f32.mrb[0].mxu0
        %v1148 = vadd.f32 %v1091, %v1147
        %v1149 = vpop.f32.mrb[0].mxu0
        %v1150 = vpop.f32.mrb[0].mxu0
        %v1151 = vadd.f32 %v1094, %v1150
        %v1152 = vpop.f32.mrb[0].mxu0
        %1153 = vdwg.mxu0
        %v1154 = vadd.f32 %v1148, %v1091
        %v1155 = vadd.f32 %v1151, %v1094
        %v1156 = vrcp.pop %v1007
        %v1157 = vmul.f32 %v1154, %v1156
        %v1158 = vmul.f32 %v1155, %v1156
        %v1159 = vlog2.pop %v1007
        %v1160 = vmul.f32 %v1159, 0.6931472
        %v1161 = vadd.f32 %v867, %v1160
        %1162 = vst [vmem:[%s218] sm:$0xff] %v1157
        %1163 = vst [vmem:[%s218 + $0x10] sm:$0xff] %v1158
        %1164 = vst [vmem:[%s225] sm:$0x1] %v1161
        %v1165 = vpack.c.bf16 %v262, %v261
        %v1166 = vpack.c.bf16 %v264, %v263
        %v1167 = vpack.c.bf16 %v266, %v265
        %v1168 = vpack.c.bf16 %v268, %v267
        %v1169 = vpack.c.bf16 %v270, %v269
        %v1170 = vpack.c.bf16 %v272, %v271
        %v1171 = vpack.c.bf16 %v274, %v273
        %v1172 = vpack.c.bf16 %v276, %v275
        %v1174 = vsel %vm341, %v1165, 0
        %v1177 = vsel %vm341, %v1166, 0
        %v1180 = vsel %vm341, %v1167, 0
        %v1183 = vsel %vm341, %v1168, 0
        %v1186 = vsel %vm341, %v1169, 0
        %v1189 = vsel %vm341, %v1170, 0
        %v1192 = vsel %vm341, %v1171, 0
        %v1195 = vsel %vm341, %v1172, 0
        %1197 = vmatprep.subr.bf16.mxu0 0
        %1198 = vmatpush1.bf16.xpose.msra.mxu0 %v1174
        %1199 = vmatprep.subr.bf16.mxu0 0
        %1200 = vmatpush1.bf16.xpose.msra.mxu0 %v1177
        %1201 = vmatprep.subr.bf16.mxu0 0
        %1202 = vmatpush1.bf16.xpose.msra.mxu0 %v1180
        %1203 = vmatprep.subr.bf16.mxu0 0
        %1204 = vmatpush1.bf16.xpose.msra.mxu0 %v1183
        %1205 = vmatprep.subr.bf16.mxu0 0
        %1206 = vmatpush1.bf16.xpose.msra.mxu0 %v1186
        %1207 = vmatprep.subr.bf16.mxu0 0
        %1208 = vmatpush1.bf16.xpose.msra.mxu0 %v1189
        %1209 = vmatprep.subr.bf16.mxu0 0
        %1210 = vmatpush1.bf16.xpose.msra.mxu0 %v1192
        %1211 = vmatprep.subr.bf16.mxu0 0
        %1212 = vmatpush1.bf16.xpose.msra.mxu0 %v1195
        %1213 = vmatprep.subr.bf16.mxu0 0
        %1214 = vmatpush1.bf16.xpose.msra.mxu0 0
        %1215 = vmatprep.subr.bf16.mxu0 0
        %1216 = vmatpush1.bf16.xpose.msra.mxu0 0
        %1217 = vmatprep.subr.bf16.mxu0 0
        %1218 = vmatpush1.bf16.xpose.msra.mxu0 0
        %1219 = vmatprep.subr.bf16.mxu0 0
        %1220 = vmatpush1.bf16.xpose.msra.mxu0 0
        %1221 = vmatprep.subr.bf16.mxu0 0
        %1222 = vmatpush1.bf16.xpose.msra.mxu0 0
        %1223 = vmatprep.subr.bf16.mxu0 0
        %1224 = vmatpush1.bf16.xpose.msra.mxu0 0
        %1225 = vmatprep.subr.bf16.mxu0 0
        %1226 = vmatpush1.bf16.xpose.msra.mxu0 0
        %1227 = vmatprep.subr.bf16.mxu0 0
        %1228 = vmatpush1.bf16.xpose.msra.mxu0 0
        %1229 = vmatprep.mubr.bf16.mxu0 0
        %1230 = vmatmul.mubr.bf16.gmra.mrb[0].mxu0 %v704
        %v1231 = vpop.f32.mrb[0].mxu0
        %v1232 = vadd.f32 0.0, %v1231
        %v1233 = vpop.f32.mrb[0].mxu0
        %v1234 = vpop.f32.mrb[0].mxu0
        %v1235 = vadd.f32 0.0, %v1234
        %v1236 = vpop.f32.mrb[0].mxu0
        %1237 = vmatprep.mubr.bf16.mxu0 0
        %1238 = vmatmul.mubr.bf16.gmra.mrb[0].mxu0 %v707
        %v1239 = vpop.f32.mrb[0].mxu0
        %v1240 = vadd.f32 0.0, %v1239
        %v1241 = vpop.f32.mrb[0].mxu0
        %v1242 = vpop.f32.mrb[0].mxu0
        %v1243 = vadd.f32 0.0, %v1242
        %v1244 = vpop.f32.mrb[0].mxu0
        %1245 = vmatprep.mubr.bf16.mxu0 0
        %1246 = vmatmul.mubr.bf16.gmra.mrb[0].mxu0 %v710
        %v1247 = vpop.f32.mrb[0].mxu0
        %v1248 = vadd.f32 0.0, %v1247
        %v1249 = vpop.f32.mrb[0].mxu0
        %v1250 = vpop.f32.mrb[0].mxu0
        %v1251 = vadd.f32 0.0, %v1250
        %v1252 = vpop.f32.mrb[0].mxu0
        %1253 = vmatprep.mubr.bf16.mxu0 0
        %1254 = vmatmul.mubr.bf16.gmra.mrb[0].mxu0 %v713
        %v1255 = vpop.f32.mrb[0].mxu0
        %v1256 = vadd.f32 0.0, %v1255
        %v1257 = vpop.f32.mrb[0].mxu0
        %v1258 = vpop.f32.mrb[0].mxu0
        %v1259 = vadd.f32 0.0, %v1258
        %v1260 = vpop.f32.mrb[0].mxu0
        %1261 = vmatprep.mubr.bf16.mxu0 0
        %1262 = vmatmul.mubr.bf16.gmra.mrb[0].mxu0 %v716
        %v1263 = vpop.f32.mrb[0].mxu0
        %v1264 = vadd.f32 0.0, %v1263
        %v1265 = vpop.f32.mrb[0].mxu0
        %v1266 = vpop.f32.mrb[0].mxu0
        %v1267 = vadd.f32 0.0, %v1266
        %v1268 = vpop.f32.mrb[0].mxu0
        %1269 = vmatprep.mubr.bf16.mxu0 0
        %1270 = vmatmul.mubr.bf16.gmra.mrb[0].mxu0 %v719
        %v1271 = vpop.f32.mrb[0].mxu0
        %v1272 = vadd.f32 0.0, %v1271
        %v1273 = vpop.f32.mrb[0].mxu0
        %v1274 = vpop.f32.mrb[0].mxu0
        %v1275 = vadd.f32 0.0, %v1274
        %v1276 = vpop.f32.mrb[0].mxu0
        %1277 = vmatprep.mubr.bf16.mxu0 0
        %1278 = vmatmul.mubr.bf16.gmra.mrb[0].mxu0 %v722
        %v1279 = vpop.f32.mrb[0].mxu0
        %v1280 = vadd.f32 0.0, %v1279
        %v1281 = vpop.f32.mrb[0].mxu0
        %v1282 = vpop.f32.mrb[0].mxu0
        %v1283 = vadd.f32 0.0, %v1282
        %v1284 = vpop.f32.mrb[0].mxu0
        %1285 = vmatprep.mubr.bf16.mxu0 0
        %1286 = vmatmul.mubr.bf16.gmra.mrb[0].mxu0 %v725
        %v1287 = vpop.f32.mrb[0].mxu0
        %v1288 = vadd.f32 0.0, %v1287
        %v1289 = vpop.f32.mrb[0].mxu0
        %v1290 = vpop.f32.mrb[0].mxu0
        %v1291 = vadd.f32 0.0, %v1290
        %v1292 = vpop.f32.mrb[0].mxu0
        %1293 = vdwg.mxu0
        %1294 = vmatprep.subr.bf16.mxu0 0
        %1295 = vmatpush1.bf16.xpose.msra.mxu0 %v1174
        %1296 = vmatprep.subr.bf16.mxu0 0
        %1297 = vmatpush1.bf16.xpose.msra.mxu0 %v1177
        %1298 = vmatprep.subr.bf16.mxu0 0
        %1299 = vmatpush1.bf16.xpose.msra.mxu0 %v1180
        %1300 = vmatprep.subr.bf16.mxu0 0
        %1301 = vmatpush1.bf16.xpose.msra.mxu0 %v1183
        %1302 = vmatprep.subr.bf16.mxu0 0
        %1303 = vmatpush1.bf16.xpose.msra.mxu0 %v1186
        %1304 = vmatprep.subr.bf16.mxu0 0
        %1305 = vmatpush1.bf16.xpose.msra.mxu0 %v1189
        %1306 = vmatprep.subr.bf16.mxu0 0
        %1307 = vmatpush1.bf16.xpose.msra.mxu0 %v1192
        %1308 = vmatprep.subr.bf16.mxu0 0
        %1309 = vmatpush1.bf16.xpose.msra.mxu0 %v1195
        %1310 = vmatprep.subr.bf16.mxu0 0
        %1311 = vmatpush1.bf16.xpose.msra.mxu0 0
        %1312 = vmatprep.subr.bf16.mxu0 0
        %1313 = vmatpush1.bf16.xpose.msra.mxu0 0
        %1314 = vmatprep.subr.bf16.mxu0 0
        %1315 = vmatpush1.bf16.xpose.msra.mxu0 0
        %1316 = vmatprep.subr.bf16.mxu0 0
        %1317 = vmatpush1.bf16.xpose.msra.mxu0 0
        %1318 = vmatprep.subr.bf16.mxu0 0
        %1319 = vmatpush1.bf16.xpose.msra.mxu0 0
        %1320 = vmatprep.subr.bf16.mxu0 0
        %1321 = vmatpush1.bf16.xpose.msra.mxu0 0
        %1322 = vmatprep.subr.bf16.mxu0 0
        %1323 = vmatpush1.bf16.xpose.msra.mxu0 0
        %1324 = vmatprep.subr.bf16.mxu0 0
        %1325 = vmatpush1.bf16.xpose.msra.mxu0 0
        %1326 = vmatprep.mubr.bf16.mxu0 0
        %1327 = vmatmul.mubr.bf16.gmra.mrb[0].mxu0 %v551
        %v1328 = vpop.f32.mrb[0].mxu0
        %v1329 = vadd.f32 0.0, %v1328
        %v1330 = vpop.f32.mrb[0].mxu0
        %v1331 = vpop.f32.mrb[0].mxu0
        %v1332 = vadd.f32 0.0, %v1331
        %v1333 = vpop.f32.mrb[0].mxu0
        %1334 = vmatprep.mubr.bf16.mxu0 0
        %1335 = vmatmul.mubr.bf16.gmra.mrb[0].mxu0 %v554
        %v1336 = vpop.f32.mrb[0].mxu0
        %v1337 = vadd.f32 0.0, %v1336
        %v1338 = vpop.f32.mrb[0].mxu0
        %v1339 = vpop.f32.mrb[0].mxu0
        %v1340 = vadd.f32 0.0, %v1339
        %v1341 = vpop.f32.mrb[0].mxu0
        %1342 = vmatprep.mubr.bf16.mxu0 0
        %1343 = vmatmul.mubr.bf16.gmra.mrb[0].mxu0 %v557
        %v1344 = vpop.f32.mrb[0].mxu0
        %v1345 = vadd.f32 0.0, %v1344
        %v1346 = vpop.f32.mrb[0].mxu0
        %v1347 = vpop.f32.mrb[0].mxu0
        %v1348 = vadd.f32 0.0, %v1347
        %v1349 = vpop.f32.mrb[0].mxu0
        %1350 = vmatprep.mubr.bf16.mxu0 0
        %1351 = vmatmul.mubr.bf16.gmra.mrb[0].mxu0 %v560
        %v1352 = vpop.f32.mrb[0].mxu0
        %v1353 = vadd.f32 0.0, %v1352
        %v1354 = vpop.f32.mrb[0].mxu0
        %v1355 = vpop.f32.mrb[0].mxu0
        %v1356 = vadd.f32 0.0, %v1355
        %v1357 = vpop.f32.mrb[0].mxu0
        %1358 = vmatprep.mubr.bf16.mxu0 0
        %1359 = vmatmul.mubr.bf16.gmra.mrb[0].mxu0 %v563
        %v1360 = vpop.f32.mrb[0].mxu0
        %v1361 = vadd.f32 0.0, %v1360
        %v1362 = vpop.f32.mrb[0].mxu0
        %v1363 = vpop.f32.mrb[0].mxu0
        %v1364 = vadd.f32 0.0, %v1363
        %v1365 = vpop.f32.mrb[0].mxu0
        %1366 = vmatprep.mubr.bf16.mxu0 0
        %1367 = vmatmul.mubr.bf16.gmra.mrb[0].mxu0 %v566
        %v1368 = vpop.f32.mrb[0].mxu0
        %v1369 = vadd.f32 0.0, %v1368
        %v1370 = vpop.f32.mrb[0].mxu0
        %v1371 = vpop.f32.mrb[0].mxu0
        %v1372 = vadd.f32 0.0, %v1371
        %v1373 = vpop.f32.mrb[0].mxu0
        %1374 = vmatprep.mubr.bf16.mxu0 0
        %1375 = vmatmul.mubr.bf16.gmra.mrb[0].mxu0 %v569
        %v1376 = vpop.f32.mrb[0].mxu0
        %v1377 = vadd.f32 0.0, %v1376
        %v1378 = vpop.f32.mrb[0].mxu0
        %v1379 = vpop.f32.mrb[0].mxu0
        %v1380 = vadd.f32 0.0, %v1379
        %v1381 = vpop.f32.mrb[0].mxu0
        %1382 = vmatprep.mubr.bf16.mxu0 0
        %1383 = vmatmul.mubr.bf16.gmra.mrb[0].mxu0 %v572
        %v1384 = vpop.f32.mrb[0].mxu0
        %v1385 = vadd.f32 0.0, %v1384
        %v1386 = vpop.f32.mrb[0].mxu0
        %v1387 = vpop.f32.mrb[0].mxu0
        %v1388 = vadd.f32 0.0, %v1387
        %v1389 = vpop.f32.mrb[0].mxu0
        %1390 = vdwg.mxu0
        %v1391 = vmax.f32 %v1232, %v1248
        %v1392 = vmax.f32 %v1235, %v1251
        %v1393 = vmax.f32 %v1240, %v1256
        %v1394 = vmax.f32 %v1243, %v1259
        %v1395 = vmax.f32 %v1391, %v1264
        %v1396 = vmax.f32 %v1392, %v1267
        %v1397 = vmax.f32 %v1393, %v1272
        %v1398 = vmax.f32 %v1394, %v1275
        %v1399 = vmax.f32 %v1395, %v1280
        %v1400 = vmax.f32 %v1396, %v1283
        %v1401 = vmax.f32 %v1397, %v1288
        %v1402 = vmax.f32 %v1398, %v1291
        %v1403 = vmax.f32 %v1399, %v1400
        %v1404 = vmax.f32 %v1401, %v1402
        %v1405 = vmax.f32 %v1403, %v1404
        %v1406 = vrot.slane %v1405, 4
        %v1407 = vmax.f32 %v1405, %v1406
        %v1408 = vrot.slane %v1407, 2
        %v1409 = vmax.f32 %v1407, %v1408
        %v1410 = vrot.slane %v1409, 1
        %v1411 = vmax.f32 %v1409, %v1410
        %v1412 = vmax.f32 %v1329, %v1345
        %v1413 = vmax.f32 %v1332, %v1348
        %v1414 = vmax.f32 %v1337, %v1353
        %v1415 = vmax.f32 %v1340, %v1356
        %v1416 = vmax.f32 %v1412, %v1361
        %v1417 = vmax.f32 %v1413, %v1364
        %v1418 = vmax.f32 %v1414, %v1369
        %v1419 = vmax.f32 %v1415, %v1372
        %v1420 = vmax.f32 %v1416, %v1377
        %v1421 = vmax.f32 %v1417, %v1380
        %v1422 = vmax.f32 %v1418, %v1385
        %v1423 = vmax.f32 %v1419, %v1388
        %v1424 = vmax.f32 %v1420, %v1421
        %v1425 = vmax.f32 %v1422, %v1423
        %v1426 = vmax.f32 %v1424, %v1425
        %v1427 = vrot.slane %v1426, 4
        %v1428 = vmax.f32 %v1426, %v1427
        %v1429 = vrot.slane %v1428, 2
        %v1430 = vmax.f32 %v1428, %v1429
        %v1431 = vrot.slane %v1430, 1
        %v1432 = vmax.f32 %v1430, %v1431
        %v1433 = vmax.f32 %v1411, %v1432
        %v1434 = vmax.f32 %v1433, %v1432
        %v1435 = vsub.f32 %v1232, %v1434
        %v1436 = vsub.f32 %v1235, %v1434
        %v1437 = vsub.f32 %v1240, %v1434
        %v1438 = vsub.f32 %v1243, %v1434
        %v1439 = vsub.f32 %v1248, %v1434
        %v1440 = vsub.f32 %v1251, %v1434
        %v1441 = vsub.f32 %v1256, %v1434
        %v1442 = vsub.f32 %v1259, %v1434
        %v1443 = vsub.f32 %v1264, %v1434
        %v1444 = vsub.f32 %v1267, %v1434
        %v1445 = vsub.f32 %v1272, %v1434
        %v1446 = vsub.f32 %v1275, %v1434
        %v1447 = vsub.f32 %v1280, %v1434
        %v1448 = vsub.f32 %v1283, %v1434
        %v1449 = vsub.f32 %v1288, %v1434
        %v1450 = vsub.f32 %v1291, %v1434
        %v1451 = vmul.f32 %v1435, 1.442695
        %v1452 = vpow.pop %v1451
        %v1453 = vmul.f32 %v1436, 1.442695
        %v1454 = vpow.pop %v1453
        %v1455 = vmul.f32 %v1437, 1.442695
        %v1456 = vpow.pop %v1455
        %v1457 = vmul.f32 %v1438, 1.442695
        %v1458 = vpow.pop %v1457
        %v1459 = vmul.f32 %v1439, 1.442695
        %v1460 = vpow.pop %v1459
        %v1461 = vmul.f32 %v1440, 1.442695
        %v1462 = vpow.pop %v1461
        %v1463 = vmul.f32 %v1441, 1.442695
        %v1464 = vpow.pop %v1463
        %v1465 = vmul.f32 %v1442, 1.442695
        %v1466 = vpow.pop %v1465
        %v1467 = vmul.f32 %v1443, 1.442695
        %v1468 = vpow.pop %v1467
        %v1469 = vmul.f32 %v1444, 1.442695
        %v1470 = vpow.pop %v1469
        %v1471 = vmul.f32 %v1445, 1.442695
        %v1472 = vpow.pop %v1471
        %v1473 = vmul.f32 %v1446, 1.442695
        %v1474 = vpow.pop %v1473
        %v1475 = vmul.f32 %v1447, 1.442695
        %v1476 = vpow.pop %v1475
        %v1477 = vmul.f32 %v1448, 1.442695
        %v1478 = vpow.pop %v1477
        %v1479 = vmul.f32 %v1449, 1.442695
        %v1480 = vpow.pop %v1479
        %v1481 = vmul.f32 %v1450, 1.442695
        %v1482 = vpow.pop %v1481
        %v1483 = vsub.f32 %v1329, %v1434
        %v1484 = vsub.f32 %v1332, %v1434
        %v1485 = vsub.f32 %v1337, %v1434
        %v1486 = vsub.f32 %v1340, %v1434
        %v1487 = vsub.f32 %v1345, %v1434
        %v1488 = vsub.f32 %v1348, %v1434
        %v1489 = vsub.f32 %v1353, %v1434
        %v1490 = vsub.f32 %v1356, %v1434
        %v1491 = vsub.f32 %v1361, %v1434
        %v1492 = vsub.f32 %v1364, %v1434
        %v1493 = vsub.f32 %v1369, %v1434
        %v1494 = vsub.f32 %v1372, %v1434
        %v1495 = vsub.f32 %v1377, %v1434
        %v1496 = vsub.f32 %v1380, %v1434
        %v1497 = vsub.f32 %v1385, %v1434
        %v1498 = vsub.f32 %v1388, %v1434
        %v1499 = vmul.f32 %v1483, 1.442695
        %v1500 = vpow.pop %v1499
        %v1501 = vmul.f32 %v1484, 1.442695
        %v1502 = vpow.pop %v1501
        %v1503 = vmul.f32 %v1485, 1.442695
        %v1504 = vpow.pop %v1503
        %v1505 = vmul.f32 %v1486, 1.442695
        %v1506 = vpow.pop %v1505
        %v1507 = vmul.f32 %v1487, 1.442695
        %v1508 = vpow.pop %v1507
        %v1509 = vmul.f32 %v1488, 1.442695
        %v1510 = vpow.pop %v1509
        %v1511 = vmul.f32 %v1489, 1.442695
        %v1512 = vpow.pop %v1511
        %v1513 = vmul.f32 %v1490, 1.442695
        %v1514 = vpow.pop %v1513
        %v1515 = vmul.f32 %v1491, 1.442695
        %v1516 = vpow.pop %v1515
        %v1517 = vmul.f32 %v1492, 1.442695
        %v1518 = vpow.pop %v1517
        %v1519 = vmul.f32 %v1493, 1.442695
        %v1520 = vpow.pop %v1519
        %v1521 = vmul.f32 %v1494, 1.442695
        %v1522 = vpow.pop %v1521
        %v1523 = vmul.f32 %v1495, 1.442695
        %v1524 = vpow.pop %v1523
        %v1525 = vmul.f32 %v1496, 1.442695
        %v1526 = vpow.pop %v1525
        %v1527 = vmul.f32 %v1497, 1.442695
        %v1528 = vpow.pop %v1527
        %v1529 = vmul.f32 %v1498, 1.442695
        %v1530 = vpow.pop %v1529
        %v1531 = vadd.f32 %v1452, %v1454
        %v1532 = vadd.f32 %v1531, %v1456
        %v1533 = vadd.f32 %v1532, %v1458
        %v1534 = vadd.f32 %v1533, %v1460
        %v1535 = vadd.f32 %v1534, %v1462
        %v1536 = vadd.f32 %v1535, %v1464
        %v1537 = vadd.f32 %v1536, %v1466
        %v1538 = vadd.f32 %v1537, %v1468
        %v1539 = vadd.f32 %v1538, %v1470
        %v1540 = vadd.f32 %v1539, %v1472
        %v1541 = vadd.f32 %v1540, %v1474
        %v1542 = vadd.f32 %v1541, %v1476
        %v1543 = vadd.f32 %v1542, %v1478
        %v1544 = vadd.f32 %v1543, %v1480
        %v1545 = vadd.f32 %v1544, %v1482
        %v1546 = vrot.slane %v1545, 4
        %v1547 = vadd.f32 %v1545, %v1546
        %v1548 = vrot.slane %v1547, 2
        %v1549 = vadd.f32 %v1547, %v1548
        %v1550 = vrot.slane %v1549, 1
        %v1551 = vadd.f32 %v1549, %v1550
        %v1552 = vadd.f32 %v1500, %v1502
        %v1553 = vadd.f32 %v1552, %v1504
        %v1554 = vadd.f32 %v1553, %v1506
        %v1555 = vadd.f32 %v1554, %v1508
        %v1556 = vadd.f32 %v1555, %v1510
        %v1557 = vadd.f32 %v1556, %v1512
        %v1558 = vadd.f32 %v1557, %v1514
        %v1559 = vadd.f32 %v1558, %v1516
        %v1560 = vadd.f32 %v1559, %v1518
        %v1561 = vadd.f32 %v1560, %v1520
        %v1562 = vadd.f32 %v1561, %v1522
        %v1563 = vadd.f32 %v1562, %v1524
        %v1564 = vadd.f32 %v1563, %v1526
        %v1565 = vadd.f32 %v1564, %v1528
        %v1566 = vadd.f32 %v1565, %v1530
        %v1567 = vrot.slane %v1566, 4
        %v1568 = vadd.f32 %v1566, %v1567
        %v1569 = vrot.slane %v1568, 2
        %v1570 = vadd.f32 %v1568, %v1569
        %v1571 = vrot.slane %v1570, 1
        %v1572 = vadd.f32 %v1570, %v1571
        %v1573 = vadd.f32 %v1551, %v1572
        %v1574 = vadd.f32 %v1573, %v1572
        %v1575 = vpack.c.bf16 %v1454, %v1452
        %v1576 = vpack.c.bf16 %v1458, %v1456
        %v1577 = vpack.c.bf16 %v1462, %v1460
        %v1578 = vpack.c.bf16 %v1466, %v1464
        %v1579 = vpack.c.bf16 %v1470, %v1468
        %v1580 = vpack.c.bf16 %v1474, %v1472
        %v1581 = vpack.c.bf16 %v1478, %v1476
        %v1582 = vpack.c.bf16 %v1482, %v1480
        %v1583 = vpack.c.bf16 %v1502, %v1500
        %v1584 = vpack.c.bf16 %v1506, %v1504
        %v1585 = vpack.c.bf16 %v1510, %v1508
        %v1586 = vpack.c.bf16 %v1514, %v1512
        %v1587 = vpack.c.bf16 %v1518, %v1516
        %v1588 = vpack.c.bf16 %v1522, %v1520
        %v1589 = vpack.c.bf16 %v1526, %v1524
        %v1590 = vpack.c.bf16 %v1530, %v1528
        %1591 = vmatprep.subr.bf16.mxu0 0
        %1592 = vmatpush1.bf16.msra.mxu0 %v1583
        %1593 = vmatprep.subr.bf16.mxu0 0
        %1594 = vmatpush1.bf16.msra.mxu0 %v1584
        %1595 = vmatprep.subr.bf16.mxu0 0
        %1596 = vmatpush1.bf16.msra.mxu0 %v1585
        %1597 = vmatprep.subr.bf16.mxu0 0
        %1598 = vmatpush1.bf16.msra.mxu0 %v1586
        %1599 = vmatprep.subr.bf16.mxu0 0
        %1600 = vmatpush1.bf16.msra.mxu0 %v1587
        %1601 = vmatprep.subr.bf16.mxu0 0
        %1602 = vmatpush1.bf16.msra.mxu0 %v1588
        %1603 = vmatprep.subr.bf16.mxu0 0
        %1604 = vmatpush1.bf16.msra.mxu0 %v1589
        %1605 = vmatprep.subr.bf16.mxu0 0
        %1606 = vmatpush1.bf16.msra.mxu0 %v1590
        %1607 = vmatprep.subr.bf16.mxu0 0
        %1608 = vmatpush1.bf16.msra.mxu0 0
        %1609 = vmatprep.subr.bf16.mxu0 0
        %1610 = vmatpush1.bf16.msra.mxu0 0
        %1611 = vmatprep.subr.bf16.mxu0 0
        %1612 = vmatpush1.bf16.msra.mxu0 0
        %1613 = vmatprep.subr.bf16.mxu0 0
        %1614 = vmatpush1.bf16.msra.mxu0 0
        %1615 = vmatprep.subr.bf16.mxu0 0
        %1616 = vmatpush1.bf16.msra.mxu0 0
        %1617 = vmatprep.subr.bf16.mxu0 0
        %1618 = vmatpush1.bf16.msra.mxu0 0
        %1619 = vmatprep.subr.bf16.mxu0 0
        %1620 = vmatpush1.bf16.msra.mxu0 0
        %1621 = vmatprep.subr.bf16.mxu0 0
        %1622 = vmatpush1.bf16.msra.mxu0 0
        %1623 = vmatprep.mubr.bf16.mxu0 0
        %1624 = vmatmul.mubr.bf16.gmra.mrb[0].mxu0 %v1105
        %v1625 = vpop.f32.mrb[0].mxu0
        %v1626 = vadd.f32 0.0, %v1625
        %v1627 = vpop.f32.mrb[0].mxu0
        %v1628 = vpop.f32.mrb[0].mxu0
        %v1629 = vadd.f32 0.0, %v1628
        %v1630 = vpop.f32.mrb[0].mxu0
        %1631 = vdwg.mxu0
        %1632 = vmatprep.subr.bf16.mxu0 0
        %1633 = vmatpush1.bf16.msra.mxu0 %v1575
        %1634 = vmatprep.subr.bf16.mxu0 0
        %1635 = vmatpush1.bf16.msra.mxu0 %v1576
        %1636 = vmatprep.subr.bf16.mxu0 0
        %1637 = vmatpush1.bf16.msra.mxu0 %v1577
        %1638 = vmatprep.subr.bf16.mxu0 0
        %1639 = vmatpush1.bf16.msra.mxu0 %v1578
        %1640 = vmatprep.subr.bf16.mxu0 0
        %1641 = vmatpush1.bf16.msra.mxu0 %v1579
        %1642 = vmatprep.subr.bf16.mxu0 0
        %1643 = vmatpush1.bf16.msra.mxu0 %v1580
        %1644 = vmatprep.subr.bf16.mxu0 0
        %1645 = vmatpush1.bf16.msra.mxu0 %v1581
        %1646 = vmatprep.subr.bf16.mxu0 0
        %1647 = vmatpush1.bf16.msra.mxu0 %v1582
        %1648 = vmatprep.subr.bf16.mxu0 0
        %1649 = vmatpush1.bf16.msra.mxu0 0
        %1650 = vmatprep.subr.bf16.mxu0 0
        %1651 = vmatpush1.bf16.msra.mxu0 0
        %1652 = vmatprep.subr.bf16.mxu0 0
        %1653 = vmatpush1.bf16.msra.mxu0 0
        %1654 = vmatprep.subr.bf16.mxu0 0
        %1655 = vmatpush1.bf16.msra.mxu0 0
        %1656 = vmatprep.subr.bf16.mxu0 0
        %1657 = vmatpush1.bf16.msra.mxu0 0
        %1658 = vmatprep.subr.bf16.mxu0 0
        %1659 = vmatpush1.bf16.msra.mxu0 0
        %1660 = vmatprep.subr.bf16.mxu0 0
        %1661 = vmatpush1.bf16.msra.mxu0 0
        %1662 = vmatprep.subr.bf16.mxu0 0
        %1663 = vmatpush1.bf16.msra.mxu0 0
        %1664 = vmatprep.mubr.bf16.mxu0 0
        %1665 = vmatmul.mubr.bf16.gmra.mrb[0].mxu0 %v1048
        %v1666 = vpop.f32.mrb[0].mxu0
        %v1667 = vadd.f32 %v1626, %v1666
        %v1668 = vpop.f32.mrb[0].mxu0
        %v1669 = vpop.f32.mrb[0].mxu0
        %v1670 = vadd.f32 %v1629, %v1669
        %v1671 = vpop.f32.mrb[0].mxu0
        %1672 = vdwg.mxu0
        %v1673 = vadd.f32 %v1667, %v1626
        %v1674 = vadd.f32 %v1670, %v1629
        %v1675 = vrcp.pop %v1574
        %v1676 = vmul.f32 %v1673, %v1675
        %v1677 = vmul.f32 %v1674, %v1675
        %v1678 = vlog2.pop %v1574
        %v1679 = vmul.f32 %v1678, 0.6931472
        %v1680 = vadd.f32 %v1434, %v1679
        %1681 = vst [vmem:[%s218 + $0x8] sm:$0xff] %v1676
        %1682 = vst [vmem:[%s218 + $0x18] sm:$0xff] %v1677
        %1683 = vst [vmem:[%s225 + $0x1] sm:$0x1] %v1680
        %s1684 = sand.u32 %s99, 1
        %s1685 = scalar_lea.sflag [#allocation3], %s1684
        %s1686 = sand.u32 %s99, 1
        %s1687 = smul.addr %s1686, 32
        %s1688 = scalar_lea.vmem [#allocation2], %s1687
        %s1689 = sand.u32 %s127, 1
        %s1690 = scalar_lea.sflag [#allocation5], %s1689
        %s1691 = sand.u32 %s127, 1
        %s1692 = smul.addr %s1691, 2
        %s1693 = scalar_lea.vmem [#allocation4], %s1692
        // Predicated region
        $region29: #{tpu_custom_call.1} parent=27 // pred_check
          %p1694 = pneg %p109
        $region30: #{tpu_custom_call.1} parent=27 // pred_check_branch
          %1696 = sbr.rel (%p1694) target = $region32
        $region31: #{tpu_custom_call.1} parent=27 // pred_region
          %s1698 = ssub.s32 512, 512
          %1699 = vsyncadd %s1685, %s1698
          %s1700 = smul.addr %s26, 4
          %s1701 = smul.addr %s25, 16
          %s1702 = sadd.s32 %s1700, %s1701
          %s1703 = smul.addr %s1702, 128
          %s1704 = scalar_lea.hbm %s2, %s1703
          %s1705 = sshll.u32 %s1688, 4
          %s1706 = int_to_ptr.vmem [resolvable:$true] %s1705
          %1711 = dma.vmem_to_hbm [thread:$0]  %s1706, 512, %s1704, %s1685, 256, 256, 16
        $region32: #{tpu_custom_call.1} parent=27 // pred_fallthru
          _
        // Predicated region
        $region33: #{tpu_custom_call.1} parent=27 // pred_check
          %p1712 = pneg %p137
        $region34: #{tpu_custom_call.1} parent=27 // pred_check_branch
          %1714 = sbr.rel (%p1712) target = $region36
        $region35: #{tpu_custom_call.1} parent=27 // pred_region
          %s1716 = ssub.s32 32, 32
          %1717 = vsyncadd %s1690, %s1716
          %s1718 = smul.addr %s25, 4
          %s1719 = sadd.s32 %s26, %s1718
          %s1720 = smul.addr %s1719, 32
          %s1721 = scalar_lea.hbm %s3, %s1720
          %s1723 = sshll.u32 %s1693, 4
          %s1724 = int_to_ptr.vmem [resolvable:$true] %s1723
          %1726 = dma.vmem_to_hbm [thread:$0]  %s1724, 32, %s1721, %s1690
        $region36: #{tpu_custom_call.1} parent=27 // pred_fallthru
          _
      $region28: #{tpu_custom_call.1} parent=5 // pred_fallthru
        _
      %p1727 = scmp.le.s32.totalorder 2, %s16
      // Predicated region
      $region37: #{tpu_custom_call.1} parent=5 // pred_check
        %p1728 = pneg %p1727
      $region38: #{tpu_custom_call.1} parent=5 // pred_check_branch
        %1730 = sbr.rel (%p1728) target = $region40
      $region39: #{tpu_custom_call.1} parent=5 // pred_region
        %s1731 = ssub.s32 %s16, 2
        // Predicated region
        $region41: #{tpu_custom_call.1} parent=39 // pred_check
          %p1732 = pneg %p115
        $region42: #{tpu_custom_call.1} parent=39 // pred_check_branch
          %1734 = sbr.rel (%p1732) target = $region44
        $region43: #{tpu_custom_call.1} parent=39 // pred_region
          %s1735 = sand.u32 %s100, 1
          %s1736 = scalar_lea.sflag [#allocation3], %s1735
          %s1737 = sand.u32 %s100, 1
          %s1738 = smul.addr %s1737, 32
          %s1739 = scalar_lea.vmem [#allocation2], %s1738
          %1740 = dma.done %s1736, 512
        $region44: #{tpu_custom_call.1} parent=39 // pred_fallthru
          _
        // Predicated region
        $region45: #{tpu_custom_call.1} parent=39 // pred_check
          %p1741 = pneg %p143
        $region46: #{tpu_custom_call.1} parent=39 // pred_check_branch
          %1743 = sbr.rel (%p1741) target = $region48
        $region47: #{tpu_custom_call.1} parent=39 // pred_region
          %s1744 = sand.u32 %s128, 1
          %s1745 = scalar_lea.sflag [#allocation5], %s1744
          %s1746 = sand.u32 %s128, 1
          %s1747 = smul.addr %s1746, 2
          %s1748 = scalar_lea.vmem [#allocation4], %s1747
          %1749 = dma.done %s1745, 32
        $region48: #{tpu_custom_call.1} parent=39 // pred_fallthru
          _
      $region40: #{tpu_custom_call.1} parent=5 // pred_fallthru
        _
    $region6: #{tpu_custom_call.1} parent=1 // loop_footer
      %s20 = sadd.s32 1, %s16
    $region7: #{tpu_custom_call.1} parent=1 // loop_footer_branch
      %15 = sbr.rel target = $region3
    $region8: #{tpu_custom_call.1} parent=1 // loop_exit
      _
    %1750 = vsyncpa [#allocation3], 1
    %s1751 = scalar_lea.sflag [#allocation3], 1
    %1752 = vsyncpa %s1751, 1
    %1753 = vsyncpa [#allocation5], 1
    %s1754 = scalar_lea.sflag [#allocation5], 1
    %1755 = vsyncpa %s1754, 1

</llo_original>
